<compile_context>
chip_gen: v7x
topology: tpu7x:2x2x1
jax: 0.10.0
libtpu: 0.0.40
codegen_flags: <defaults>
</compile_context>

<pallas_src>
import functools

import jax
import jax.numpy as jnp
from jax.experimental import pallas as pl
from jax.experimental.pallas import tpu as pltpu

BN_EPS = 1e-5


# ---------------------------------------------------------------------------
# Fused kernel: extractor tail (AvgPool2d(8) + trunk_fc) + NONLocalNet head.
# One grid step == one batch sample.
# ---------------------------------------------------------------------------
def _fused_kernel(feat_ref, pool_ref, wfc_ref, bfc_ref,
                  wg_ref, bg_ref, ww_ref, bw_ref, bns_ref, bnb_ref,
                  wmatch_ref, bmatch_ref,
                  outx_ref, match_ref, *, num_pool):
    feat = feat_ref[0]                                             # (C, HW), NCHW block as-is

    # --- extractor tail ----------------------------------------------------
    # AvgPool2d(8): one MXU contraction over HW (M = C rows).
    glT = jnp.dot(feat, pool_ref[...],
                  preferred_element_type=jnp.float32)              # (C, P) == gl == f_x == f_y

    # trunk_fc over the flattened (C*P) feature (PyTorch flatten order c*P+p).
    # Mosaic dot_general contracts one dim, so the (C, P) double contraction is
    # unrolled over P (static, <= 4); negligible vs. the feature-map DMA.
    acc = jnp.dot(wfc_ref[0], glT[:, 0:1],
                  preferred_element_type=jnp.float32)              # (Kc, 1)
    for p in range(1, num_pool):
        acc = acc + jnp.dot(wfc_ref[p], glT[:, p:p + 1],
                            preferred_element_type=jnp.float32)
    outx_ref[0] = acc + bfc_ref[...]                               # featureOut (== out_x == out_y)

    # --- NONLocalNet(y=f_x, x=f_y) match head --------------------------------
    # g 1x1 conv: contract over C; the S == P spatial positions stay on lanes.
    g = jnp.dot(wg_ref[...], glT,
                preferred_element_type=jnp.float32) + bg_ref[...]  # (inter, S)
    # sub_sample MaxPool2d(2,2) on the 2x2 map == per-sample global max (one
    # lane reduce).  softmax over this single pooled KV position is exactly 1,
    # so z == broadcast(g_pool): theta / phi / softmax / attention matmuls drop
    # out (exact; checked against the long-form reference in __main__).
    g_pool = jnp.max(g, axis=1, keepdims=True)                     # (inter, 1)
    # W 1x1 conv on the spatially-constant z, then eval-mode BatchNorm2d folded
    # to a per-channel affine (scale/shift precomputed at init).
    wz = jnp.dot(ww_ref[...], g_pool,
                 preferred_element_type=jnp.float32) + bw_ref[...]  # (C, 1)
    wz = wz * bns_ref[...] + bnb_ref[...]
    # Final fc over the flattened (C*S) map; z is constant over s so the fc
    # weight is pre-folded over s (exact).  Single MXU dot.
    match_ref[0] = (jnp.dot(wmatch_ref[...], wz,
                            preferred_element_type=jnp.float32) + bmatch_ref[...])


def self_match_net_forward(backbone_feat, prep):
    """backbone_feat: (B, C, H, W) trunk1 feature map (NCHW).
    Returns (out_x, out_y, match_out) exactly as SelfMatchNet.forward."""
    B, C, H, W = backbone_feat.shape
    HW = H * W
    P = prep["pool"].shape[1]
    Kc = prep["bfc"].shape[0]
    inter = prep["wg"].shape[0]
    K2 = prep["wmatch"].shape[0]
    feat = backbone_feat.reshape(B, C, HW)         # trailing-dim merge: no data movement

    def const(shape):
        nd = len(shape)
        return pl.BlockSpec(shape, lambda b, nd=nd: (0,) * nd)

    out_col, match_col = pl.pallas_call(
        functools.partial(_fused_kernel, num_pool=P),
        out_shape=(jax.ShapeDtypeStruct((B, Kc, 1), jnp.float32),
                   jax.ShapeDtypeStruct((B, K2, 1), jnp.float32)),
        grid=(B,),
        in_specs=[pl.BlockSpec((1, C, HW), lambda b: (b, 0, 0)),
                  const((HW, P)),            # avg-pool operator
                  const((P, Kc, C)),         # trunk_fc weight, (p, k, c)
                  const((Kc, 1)),            # trunk_fc bias
                  const((inter, C)),         # g 1x1 conv weight
                  const((inter, 1)),         # g bias
                  const((C, inter)),         # W 1x1 conv weight
                  const((C, 1)),             # W bias
                  const((C, 1)),             # BN scale (folded)
                  const((C, 1)),             # BN shift (folded)
                  const((K2, C)),            # match fc weight folded over s
                  const((K2, 1))],           # match fc bias
        out_specs=(pl.BlockSpec((1, Kc, 1), lambda b: (b, 0, 0)),
                   pl.BlockSpec((1, K2, 1), lambda b: (b, 0, 0))),
        compiler_params=pltpu.CompilerParams(
            dimension_semantics=("parallel",)),    # batch axis -> megacore on v7x
    )(feat, prep["pool"], prep["wfc"], prep["bfc"],
      prep["wg"], prep["bg"], prep["ww"], prep["bw"],
      prep["bn_scale"], prep["bn_shift"], prep["wmatch"], prep["bmatch"])

    out = out_col.reshape(B, Kc)
    match_out = match_col.reshape(B, K2)
    # f_x, out_x = extractor(x); f_y, out_y = extractor(x): identical in
    # deterministic eval mode, computed once and reused (exact).
    return out, out, match_out


# ---------------------------------------------------------------------------
# One-time constant preprocessing + synthetic parameters
# ---------------------------------------------------------------------------
def make_avgpool_matrix(H, W, k):
    """(HW, P) operator equal to nn.AvgPool2d(k) on a divisible (H, W) map."""
    assert H % k == 0 and W % k == 0, "AvgPool2d(8) lowering requires divisible H, W"
    Hp, Wp = H // k, W // k
    idx = jnp.arange(H * W)
    h, w = idx // W, idx % W
    p = (h // k) * Wp + (w // k)
    return jnp.zeros((H * W, Hp * Wp), jnp.float32).at[idx, p].set(1.0 / (k * k))


def init_raw_params(key, class_num, C, P):
    """Synthetic module parameters in their native PyTorch layouts."""
    inter = max(C // 2, 1)
    ks = jax.random.split(key, 16)

    def w(k, shape, scale=0.05):
        return (scale * jax.random.normal(k, shape)).astype(jnp.float32)

    return {
        # extractor tail: trunk_fc = Linear(C*P, class_num)
        "trunk_fc_w": w(ks[0], (class_num, C * P)),
        "trunk_fc_b": w(ks[1], (class_num,)),
        # NONLocalNet(in_channels=C): 1x1 convs
        "g_w": w(ks[2], (inter, C)), "g_b": w(ks[3], (inter,)),
        "theta_w": w(ks[4], (inter, C)), "theta_b": w(ks[5], (inter,)),
        "phi_w": w(ks[6], (inter, C)), "phi_b": w(ks[7], (inter,)),
        "W_w": w(ks[8], (C, inter)), "W_b": w(ks[9], (C,)),
        # Eval-mode BatchNorm2d stats.  The module inits gamma = beta = 0
        # (nn.init.constant_), which makes the head collapse to the fc bias;
        # random values are used here purely so the test exercises the full
        # head arithmetic — the kernel implements the general affine either way.
        "bn_gamma": w(ks[10], (C,), 1.0),
        "bn_beta": w(ks[11], (C,), 0.1),
        "bn_mean": w(ks[12], (C,), 0.1),
        "bn_var": (1.0 + 0.1 * jax.random.uniform(ks[13], (C,))).astype(jnp.float32),
        # match fc: Linear(C*P, 2)
        "match_fc_w": w(ks[14], (2, C * P)),
        "match_fc_b": w(ks[15], (2,)),
    }


def prepare_inference_params(raw, H, W, pool_k=8):
    """Hoisted one-time constant preprocessing (per perf review): avg-pool
    operator, weight rearrangements, eval-mode BN -> affine fold, fc fold over
    the spatially-constant positions, bias reshapes."""
    pool = make_avgpool_matrix(H, W, pool_k)                        # (HW, P)
    P = pool.shape[1]
    Kc, CP = raw["trunk_fc_w"].shape
    C = raw["W_b"].shape[0]
    K2, CS = raw["match_fc_w"].shape
    assert CP == C * P, "trunk_fc expects the flattened (C*P) pooled feature"
    assert CS == C * P, "NONLocalNet fc expects the flattened (C*S) map with S == P"
    assert P == 4, "MaxPool2d(2,2) lowered as a global max assumes a 2x2 pooled map"

    inv_std = 1.0 / jnp.sqrt(raw["bn_var"] + BN_EPS)
    bn_scale = raw["bn_gamma"] * inv_std
    bn_shift = raw["bn_beta"] - raw["bn_mean"] * bn_scale

    return {
        "pool": pool,
        # trunk_fc weight rearranged so wfc[p, k, c] == trunk_fc_w[k, c*P + p]
        "wfc": jnp.transpose(raw["trunk_fc_w"].reshape(Kc, C, P), (2, 0, 1)),
        "bfc": raw["trunk_fc_b"].reshape(Kc, 1),
        "wg": raw["g_w"], "bg": raw["g_b"].reshape(-1, 1),
        "ww": raw["W_w"], "bw": raw["W_b"].reshape(C, 1),
        "bn_scale": bn_scale.reshape(C, 1),
        "bn_shift": bn_shift.reshape(C, 1),
        # match fc weight folded over s: wmatch[k, c] = sum_s match_fc_w[k, c*S + s]
        "wmatch": raw["match_fc_w"].reshape(K2, C, P).sum(axis=2),
        "bmatch": raw["match_fc_b"].reshape(K2, 1),
    }


# ---------------------------------------------------------------------------
# Pure-JAX long-form reference (keeps theta / phi / softmax) for validation
# ---------------------------------------------------------------------------
def reference_forward(backbone_feat, raw, pool):
    B, C, H, W = backbone_feat.shape
    P = pool.shape[1]
    glT = jnp.einsum("bch,hp->bcp", backbone_feat.reshape(B, C, H * W), pool)  # AvgPool2d(8)
    out = glT.reshape(B, C * P) @ raw["trunk_fc_w"].T + raw["trunk_fc_b"]

    def conv1x1(wt, b, inp):                       # inp: (B, C_in, S)
        return jnp.einsum("oc,bcs->bos", wt, inp) + b[None, :, None]

    x = y = glT                                    # f_x == f_y
    g_x = conv1x1(raw["g_w"], raw["g_b"], x).max(axis=2, keepdims=True)       # sub_sample pool
    g_x = jnp.transpose(g_x, (0, 2, 1))                                       # (B, 1, inter)
    theta_y = jnp.transpose(conv1x1(raw["theta_w"], raw["theta_b"], y), (0, 2, 1))
    phi_x = conv1x1(raw["phi_w"], raw["phi_b"], x).max(axis=2, keepdims=True)
    f = jnp.einsum("bsi,bik->bsk", theta_y, phi_x)
    f = jax.nn.softmax(f, axis=-1)
    z = jnp.einsum("bsk,bki->bis", f, g_x)                                    # (B, inter, S)
    wz = conv1x1(raw["W_w"], raw["W_b"], z)
    inv_std = 1.0 / jnp.sqrt(raw["bn_var"] + BN_EPS)
    wz = ((wz - raw["bn_mean"][None, :, None]) * (raw["bn_gamma"] * inv_std)[None, :, None]
          + raw["bn_beta"][None, :, None])
    match = wz.reshape(B, C * P) @ raw["match_fc_w"].T + raw["match_fc_b"]
    return out, match


if __name__ == "__main__":
    key = jax.random.PRNGKey(0)
    k_feat, k_par = jax.random.split(key)
    # Small-shape stand-in for the (b, 2048, ., .) trunk1 output: 2048 -> 32 ch.
    B, C, H, W = 2, 32, 16, 16
    class_num = 5
    P = (H // 8) * (W // 8)                        # pooled 2x2 -> 4 positions
    backbone_feat = jax.random.normal(k_feat, (B, C, H, W), jnp.float32)

    raw = init_raw_params(k_par, class_num, C=C, P=P)
    prep = prepare_inference_params(raw, H, W)     # hoisted one-time constant prep

    fwd = jax.jit(self_match_net_forward)
    out_x, out_y, match_out = fwd(backbone_feat, prep)
    out_x, out_y, match_out = jax.block_until_ready((out_x, out_y, match_out))

    assert out_x.shape == (B, class_num) and out_y.shape == (B, class_num)
    assert match_out.shape == (B, 2)

    ref_out, ref_match = reference_forward(backbone_feat, raw, prep["pool"])
    assert jnp.allclose(out_x, ref_out, rtol=5e-2, atol=1e-3)
    assert jnp.allclose(out_y, ref_out, rtol=5e-2, atol=1e-3)
    assert jnp.allclose(match_out, ref_match, rtol=5e-2, atol=1e-3)
    print("KERNEL_OK")
</pallas_src>

<mosaic_0001>
module attributes {stable_mosaic.version = 11 : i64} {
  func.func @_fused_kernel(%arg0: i32, %arg1: memref<1x32x256xf32, #tpu.memory_space<vmem>>, %arg2: memref<256x4xf32, #tpu.memory_space<vmem>>, %arg3: memref<4x5x32xf32, #tpu.memory_space<vmem>>, %arg4: memref<5x1xf32, #tpu.memory_space<vmem>>, %arg5: memref<16x32xf32, #tpu.memory_space<vmem>>, %arg6: memref<16x1xf32, #tpu.memory_space<vmem>>, %arg7: memref<32x16xf32, #tpu.memory_space<vmem>>, %arg8: memref<32x1xf32, #tpu.memory_space<vmem>>, %arg9: memref<32x1xf32, #tpu.memory_space<vmem>>, %arg10: memref<32x1xf32, #tpu.memory_space<vmem>>, %arg11: memref<2x32xf32, #tpu.memory_space<vmem>>, %arg12: memref<2x1xf32, #tpu.memory_space<vmem>>, %arg13: memref<1x5x1xf32, #tpu.memory_space<vmem>>, %arg14: memref<1x2x1xf32, #tpu.memory_space<vmem>>) attributes {dimension_semantics = [#tpu.dimension_semantics<parallel>], iteration_bounds = array<i64: 2>, scalar_prefetch = 0 : i64, scratch_operands = 0 : i64, tpu.core_type = #tpu.core_type<tc>, window_params = [{transform_indices = @transform_0, window_bounds = array<i64: 1, 32, 256>}, {pipeline_mode = #tpu.pipeline_mode<synchronous>, transform_indices = @transform_1, window_bounds = array<i64: 256, 4>}, {pipeline_mode = #tpu.pipeline_mode<synchronous>, transform_indices = @transform_2, window_bounds = array<i64: 4, 5, 32>}, {pipeline_mode = #tpu.pipeline_mode<synchronous>, transform_indices = @transform_3, window_bounds = array<i64: 5, 1>}, {pipeline_mode = #tpu.pipeline_mode<synchronous>, transform_indices = @transform_4, window_bounds = array<i64: 16, 32>}, {pipeline_mode = #tpu.pipeline_mode<synchronous>, transform_indices = @transform_5, window_bounds = array<i64: 16, 1>}, {pipeline_mode = #tpu.pipeline_mode<synchronous>, transform_indices = @transform_6, window_bounds = array<i64: 32, 16>}, {pipeline_mode = #tpu.pipeline_mode<synchronous>, transform_indices = @transform_7, window_bounds = array<i64: 32, 1>}, {pipeline_mode = #tpu.pipeline_mode<synchronous>, transform_indices = @transform_8, window_bounds = array<i64: 32, 1>}, {pipeline_mode = #tpu.pipeline_mode<synchronous>, transform_indices = @transform_9, window_bounds = array<i64: 32, 1>}, {pipeline_mode = #tpu.pipeline_mode<synchronous>, transform_indices = @transform_10, window_bounds = array<i64: 2, 32>}, {pipeline_mode = #tpu.pipeline_mode<synchronous>, transform_indices = @transform_11, window_bounds = array<i64: 2, 1>}, {transform_indices = @transform_12, window_bounds = array<i64: 1, 5, 1>}, {transform_indices = @transform_13, window_bounds = array<i64: 1, 2, 1>}]} {
    %c0 = arith.constant 0 : index
    %c0_0 = arith.constant 0 : index
    %c0_1 = arith.constant 0 : index
    %0 = vector.load %arg1[%c0, %c0_0, %c0_1] : memref<1x32x256xf32, #tpu.memory_space<vmem>>, vector<1x32x256xf32>
    %1 = vector.shape_cast %0 : vector<1x32x256xf32> to vector<32x256xf32>
    %c0_2 = arith.constant 0 : index
    %c0_3 = arith.constant 0 : index
    %2 = vector.load %arg2[%c0_2, %c0_3] : memref<256x4xf32, #tpu.memory_space<vmem>>, vector<256x4xf32>
    %cst = arith.constant dense<0.000000e+00> : vector<32x4xf32>
    %3 = tpu.matmul %1, %2, %cst {dimension_numbers = #tpu.dot_dimension_numbers<[1], [0], [0], [1], [0, 0, 1, 1], [], []>} : vector<32x256xf32>, vector<256x4xf32>, vector<32x4xf32> -> vector<32x4xf32>
    %c0_4 = arith.constant 0 : index
    %c0_5 = arith.constant 0 : index
    %c0_6 = arith.constant 0 : index
    %4 = vector.load %arg3[%c0_4, %c0_5, %c0_6] : memref<4x5x32xf32, #tpu.memory_space<vmem>>, vector<1x5x32xf32>
    %5 = vector.shape_cast %4 : vector<1x5x32xf32> to vector<5x32xf32>
    %6 = vector.extract_strided_slice %3 {offsets = [0, 0], sizes = [32, 1], strides = [1, 1]} : vector<32x4xf32> to vector<32x1xf32>
    %cst_7 = arith.constant dense<0.000000e+00> : vector<5x1xf32>
    %7 = tpu.matmul %5, %6, %cst_7 {dimension_numbers = #tpu.dot_dimension_numbers<[1], [0], [0], [1], [0, 0, 1, 1], [], []>} : vector<5x32xf32>, vector<32x1xf32>, vector<5x1xf32> -> vector<5x1xf32>
    %c1 = arith.constant 1 : index
    %c0_8 = arith.constant 0 : index
    %c0_9 = arith.constant 0 : index
    %8 = vector.load %arg3[%c1, %c0_8, %c0_9] : memref<4x5x32xf32, #tpu.memory_space<vmem>>, vector<1x5x32xf32>
    %9 = vector.shape_cast %8 : vector<1x5x32xf32> to vector<5x32xf32>
    %10 = vector.extract_strided_slice %3 {offsets = [0, 1], sizes = [32, 1], strides = [1, 1]} : vector<32x4xf32> to vector<32x1xf32>
    %cst_10 = arith.constant dense<0.000000e+00> : vector<5x1xf32>
    %11 = tpu.matmul %9, %10, %cst_10 {dimension_numbers = #tpu.dot_dimension_numbers<[1], [0], [0], [1], [0, 0, 1, 1], [], []>} : vector<5x32xf32>, vector<32x1xf32>, vector<5x1xf32> -> vector<5x1xf32>
    %12 = arith.addf %7, %11 : vector<5x1xf32>
    %c2 = arith.constant 2 : index
    %c0_11 = arith.constant 0 : index
    %c0_12 = arith.constant 0 : index
    %13 = vector.load %arg3[%c2, %c0_11, %c0_12] : memref<4x5x32xf32, #tpu.memory_space<vmem>>, vector<1x5x32xf32>
    %14 = vector.shape_cast %13 : vector<1x5x32xf32> to vector<5x32xf32>
    %15 = vector.extract_strided_slice %3 {offsets = [0, 2], sizes = [32, 1], strides = [1, 1]} : vector<32x4xf32> to vector<32x1xf32>
    %cst_13 = arith.constant dense<0.000000e+00> : vector<5x1xf32>
    %16 = tpu.matmul %14, %15, %cst_13 {dimension_numbers = #tpu.dot_dimension_numbers<[1], [0], [0], [1], [0, 0, 1, 1], [], []>} : vector<5x32xf32>, vector<32x1xf32>, vector<5x1xf32> -> vector<5x1xf32>
    %17 = arith.addf %12, %16 : vector<5x1xf32>
    %c3 = arith.constant 3 : index
    %c0_14 = arith.constant 0 : index
    %c0_15 = arith.constant 0 : index
    %18 = vector.load %arg3[%c3, %c0_14, %c0_15] : memref<4x5x32xf32, #tpu.memory_space<vmem>>, vector<1x5x32xf32>
    %19 = vector.shape_cast %18 : vector<1x5x32xf32> to vector<5x32xf32>
    %20 = vector.extract_strided_slice %3 {offsets = [0, 3], sizes = [32, 1], strides = [1, 1]} : vector<32x4xf32> to vector<32x1xf32>
    %cst_16 = arith.constant dense<0.000000e+00> : vector<5x1xf32>
    %21 = tpu.matmul %19, %20, %cst_16 {dimension_numbers = #tpu.dot_dimension_numbers<[1], [0], [0], [1], [0, 0, 1, 1], [], []>} : vector<5x32xf32>, vector<32x1xf32>, vector<5x1xf32> -> vector<5x1xf32>
    %22 = arith.addf %17, %21 : vector<5x1xf32>
    %c0_17 = arith.constant 0 : index
    %c0_18 = arith.constant 0 : index
    %23 = vector.load %arg4[%c0_17, %c0_18] : memref<5x1xf32, #tpu.memory_space<vmem>>, vector<5x1xf32>
    %24 = arith.addf %22, %23 : vector<5x1xf32>
    %c0_19 = arith.constant 0 : index
    %c0_20 = arith.constant 0 : index
    %c0_21 = arith.constant 0 : index
    %25 = vector.load %arg13[%c0_19, %c0_20, %c0_21] : memref<1x5x1xf32, #tpu.memory_space<vmem>>, vector<1x5x1xf32>
    %26 = vector.shape_cast %25 : vector<1x5x1xf32> to vector<5x1xf32>
    %27 = vector.shape_cast %24 : vector<5x1xf32> to vector<1x5x1xf32>
    tpu.vector_store %arg13[%c0_19, %c0_20, %c0_21], %27 {strides = array<i32>} : memref<1x5x1xf32, #tpu.memory_space<vmem>>, vector<1x5x1xf32>,
    %c0_22 = arith.constant 0 : index
    %c0_23 = arith.constant 0 : index
    %28 = vector.load %arg5[%c0_22, %c0_23] : memref<16x32xf32, #tpu.memory_space<vmem>>, vector<16x32xf32>
    %cst_24 = arith.constant dense<0.000000e+00> : vector<16x4xf32>
    %29 = tpu.matmul %28, %3, %cst_24 {dimension_numbers = #tpu.dot_dimension_numbers<[1], [0], [0], [1], [0, 0, 1, 1], [], []>} : vector<16x32xf32>, vector<32x4xf32>, vector<16x4xf32> -> vector<16x4xf32>
    %c0_25 = arith.constant 0 : index
    %c0_26 = arith.constant 0 : index
    %30 = vector.load %arg6[%c0_25, %c0_26] : memref<16x1xf32, #tpu.memory_space<vmem>>, vector<16x1xf32>
    %31 = vector.broadcast %30 : vector<16x1xf32> to vector<16x4xf32>
    %32 = arith.addf %29, %31 : vector<16x4xf32>
    %cst_27 = arith.constant dense<0xFF800000> : vector<16xf32>
    %33 = vector.multi_reduction <maximumf>, %32, %cst_27 [1] : vector<16x4xf32> to vector<16xf32>
    %34 = vector.shape_cast %33 : vector<16xf32> to vector<16x1xf32>
    %c0_28 = arith.constant 0 : index
    %c0_29 = arith.constant 0 : index
    %35 = vector.load %arg7[%c0_28, %c0_29] : memref<32x16xf32, #tpu.memory_space<vmem>>, vector<32x16xf32>
    %cst_30 = arith.constant dense<0.000000e+00> : vector<32x1xf32>
    %36 = tpu.matmul %35, %34, %cst_30 {dimension_numbers = #tpu.dot_dimension_numbers<[1], [0], [0], [1], [0, 0, 1, 1], [], []>} : vector<32x16xf32>, vector<16x1xf32>, vector<32x1xf32> -> vector<32x1xf32>
    %c0_31 = arith.constant 0 : index
    %c0_32 = arith.constant 0 : index
    %37 = vector.load %arg8[%c0_31, %c0_32] : memref<32x1xf32, #tpu.memory_space<vmem>>, vector<32x1xf32>
    %38 = arith.addf %36, %37 : vector<32x1xf32>
    %c0_33 = arith.constant 0 : index
    %c0_34 = arith.constant 0 : index
    %39 = vector.load %arg9[%c0_33, %c0_34] : memref<32x1xf32, #tpu.memory_space<vmem>>, vector<32x1xf32>
    %40 = arith.mulf %38, %39 : vector<32x1xf32>
    %c0_35 = arith.constant 0 : index
    %c0_36 = arith.constant 0 : index
    %41 = vector.load %arg10[%c0_35, %c0_36] : memref<32x1xf32, #tpu.memory_space<vmem>>, vector<32x1xf32>
    %42 = arith.addf %40, %41 : vector<32x1xf32>
    %c0_37 = arith.constant 0 : index
    %c0_38 = arith.constant 0 : index
    %43 = vector.load %arg11[%c0_37, %c0_38] : memref<2x32xf32, #tpu.memory_space<vmem>>, vector<2x32xf32>
    %cst_39 = arith.constant dense<0.000000e+00> : vector<2x1xf32>
    %44 = tpu.matmul %43, %42, %cst_39 {dimension_numbers = #tpu.dot_dimension_numbers<[1], [0], [0], [1], [0, 0, 1, 1], [], []>} : vector<2x32xf32>, vector<32x1xf32>, vector<2x1xf32> -> vector<2x1xf32>
    %c0_40 = arith.constant 0 : index
    %c0_41 = arith.constant 0 : index
    %45 = vector.load %arg12[%c0_40, %c0_41] : memref<2x1xf32, #tpu.memory_space<vmem>>, vector<2x1xf32>
    %46 = arith.addf %44, %45 : vector<2x1xf32>
    %c0_42 = arith.constant 0 : index
    %c0_43 = arith.constant 0 : index
    %c0_44 = arith.constant 0 : index
    %47 = vector.load %arg14[%c0_42, %c0_43, %c0_44] : memref<1x2x1xf32, #tpu.memory_space<vmem>>, vector<1x2x1xf32>
    %48 = vector.shape_cast %47 : vector<1x2x1xf32> to vector<2x1xf32>
    %49 = vector.shape_cast %46 : vector<2x1xf32> to vector<1x2x1xf32>
    tpu.vector_store %arg14[%c0_42, %c0_43, %c0_44], %49 {strides = array<i32>} : memref<1x2x1xf32, #tpu.memory_space<vmem>>, vector<1x2x1xf32>,
    return
  }
  func.func @transform_0(%arg0: i32) -> (i32, i32, i32) {
    %c0_i32 = arith.constant 0 : i32
    %c0_i32_0 = arith.constant 0 : i32
    %c0_i32_1 = arith.constant 0 : i32
    return %arg0, %c0_i32, %c0_i32_0 : i32, i32, i32
  }
  func.func @transform_1(%arg0: i32) -> (i32, i32) {
    %c0_i32 = arith.constant 0 : i32
    %c0_i32_0 = arith.constant 0 : i32
    %c0_i32_1 = arith.constant 0 : i32
    return %c0_i32, %c0_i32_0 : i32, i32
  }
  func.func @transform_2(%arg0: i32) -> (i32, i32, i32) {
    %c0_i32 = arith.constant 0 : i32
    %c0_i32_0 = arith.constant 0 : i32
    %c0_i32_1 = arith.constant 0 : i32
    %c0_i32_2 = arith.constant 0 : i32
    return %c0_i32, %c0_i32_0, %c0_i32_1 : i32, i32, i32
  }
  func.func @transform_3(%arg0: i32) -> (i32, i32) {
    %c0_i32 = arith.constant 0 : i32
    %c0_i32_0 = arith.constant 0 : i32
    %c0_i32_1 = arith.constant 0 : i32
    return %c0_i32, %c0_i32_0 : i32, i32
  }
  func.func @transform_4(%arg0: i32) -> (i32, i32) {
    %c0_i32 = arith.constant 0 : i32
    %c0_i32_0 = arith.constant 0 : i32
    %c0_i32_1 = arith.constant 0 : i32
    return %c0_i32, %c0_i32_0 : i32, i32
  }
  func.func @transform_5(%arg0: i32) -> (i32, i32) {
    %c0_i32 = arith.constant 0 : i32
    %c0_i32_0 = arith.constant 0 : i32
    %c0_i32_1 = arith.constant 0 : i32
    return %c0_i32, %c0_i32_0 : i32, i32
  }
  func.func @transform_6(%arg0: i32) -> (i32, i32) {
    %c0_i32 = arith.constant 0 : i32
    %c0_i32_0 = arith.constant 0 : i32
    %c0_i32_1 = arith.constant 0 : i32
    return %c0_i32, %c0_i32_0 : i32, i32
  }
  func.func @transform_7(%arg0: i32) -> (i32, i32) {
    %c0_i32 = arith.constant 0 : i32
    %c0_i32_0 = arith.constant 0 : i32
    %c0_i32_1 = arith.constant 0 : i32
    return %c0_i32, %c0_i32_0 : i32, i32
  }
  func.func @transform_8(%arg0: i32) -> (i32, i32) {
    %c0_i32 = arith.constant 0 : i32
    %c0_i32_0 = arith.constant 0 : i32
    %c0_i32_1 = arith.constant 0 : i32
    return %c0_i32, %c0_i32_0 : i32, i32
  }
  func.func @transform_9(%arg0: i32) -> (i32, i32) {
    %c0_i32 = arith.constant 0 : i32
    %c0_i32_0 = arith.constant 0 : i32
    %c0_i32_1 = arith.constant 0 : i32
    return %c0_i32, %c0_i32_0 : i32, i32
  }
  func.func @transform_10(%arg0: i32) -> (i32, i32) {
    %c0_i32 = arith.constant 0 : i32
    %c0_i32_0 = arith.constant 0 : i32
    %c0_i32_1 = arith.constant 0 : i32
    return %c0_i32, %c0_i32_0 : i32, i32
  }
  func.func @transform_11(%arg0: i32) -> (i32, i32) {
    %c0_i32 = arith.constant 0 : i32
    %c0_i32_0 = arith.constant 0 : i32
    %c0_i32_1 = arith.constant 0 : i32
    return %c0_i32, %c0_i32_0 : i32, i32
  }
  func.func @transform_12(%arg0: i32) -> (i32, i32, i32) {
    %c0_i32 = arith.constant 0 : i32
    %c0_i32_0 = arith.constant 0 : i32
    %c0_i32_1 = arith.constant 0 : i32
    return %arg0, %c0_i32, %c0_i32_0 : i32, i32, i32
  }
  func.func @transform_13(%arg0: i32) -> (i32, i32, i32) {
    %c0_i32 = arith.constant 0 : i32
    %c0_i32_0 = arith.constant 0 : i32
    %c0_i32_1 = arith.constant 0 : i32
    return %arg0, %c0_i32, %c0_i32_0 : i32, i32, i32
  }
}

</mosaic_0001>

<llo_original>
// kernel: self_match_net_forward.1
$region0: #{self_match_net_forward.1}
  #allocation0 [shape = 'u32[]', space=smem, size = 0x4, offset = 0x4, fixed_abs, tag = 'smem constant byte address 0x4 - core index']
  #allocation1 [shape = 'u32[144,128]{1,0:T(1,128)}', space=vmem, size = 0x12000, scoped, tag = 'internal scratch']
  %s0 = inlined_call_operand.vmem [shape: f32[2,32,256], index: 0, kind: input, shape index: {}]
  %s1 = inlined_call_operand.vmem [shape: f32[256,4], index: 1, kind: input, shape index: {}]
  %s2 = inlined_call_operand.vmem [shape: f32[4,5,32], index: 2, kind: input, shape index: {}]
  %s3 = inlined_call_operand.vmem [shape: f32[5,1], index: 3, kind: input, shape index: {}]
  %s4 = inlined_call_operand.vmem [shape: f32[16,32], index: 4, kind: input, shape index: {}]
  %s5 = inlined_call_operand.vmem [shape: f32[16,1], index: 5, kind: input, shape index: {}]
  %s6 = inlined_call_operand.vmem [shape: f32[32,16], index: 6, kind: input, shape index: {}]
  %s7 = inlined_call_operand.vmem [shape: f32[32,1], index: 7, kind: input, shape index: {}]
  %s8 = inlined_call_operand.vmem [shape: f32[32,1], index: 8, kind: input, shape index: {}]
  %s9 = inlined_call_operand.vmem [shape: f32[32,1], index: 9, kind: input, shape index: {}]
  %s10 = inlined_call_operand.vmem [shape: f32[2,32], index: 10, kind: input, shape index: {}]
  %s11 = inlined_call_operand.vmem [shape: f32[2,1], index: 11, kind: input, shape index: {}]
  %s12 = inlined_call_operand.vmem [shape: f32[2,5,1], index: 12, kind: output, shape index: {0}]
  %s13 = inlined_call_operand.vmem [shape: f32[2,2,1], index: 13, kind: output, shape index: {1}]
  %14 = xla_tuple %s12, %s13
  %s15 = sld [smem:[#allocation0]]
  $region89: #{self_match_net_forward.1} parent=0
    _
  %s17 = ssub.s32 1, %s15
  %s18 = scalar_select 0, %s17, %s15
  loop: start=0, step=1, limit=4
  $region2: #{self_match_net_forward.1} parent=0 // loop_pre_header
    _
  $region3: #{self_match_net_forward.1} parent=0 // loop_header
    %s20 = sphi 0, %s24
    %p21 = scmp.ge.s32.totalorder %s20, 4
    %s30 = sphi 0, %s32
    %s33 = sphi 0, %s30
    %s34 = sphi 0, %s33
    %s50 = sphi 0, %s34
    %s54 = sphi 0, %s54
    %s56 = sphi 0, %s54
    %s57 = sphi 0, %s56
    %s71 = sphi 0, %s57
    %s75 = sphi 0, %s75
    %s77 = sphi 0, %s75
    %s78 = sphi 0, %s77
    %s92 = sphi 0, %s78
    %s96 = sphi 0, %s96
    %s98 = sphi 0, %s96
    %s99 = sphi 0, %s98
    %s113 = sphi 0, %s99
    %s117 = sphi 0, %s117
    %s119 = sphi 0, %s117
    %s120 = sphi 0, %s119
    %s134 = sphi 0, %s120
    %s138 = sphi 0, %s138
    %s140 = sphi 0, %s138
    %s141 = sphi 0, %s140
    %s155 = sphi 0, %s141
    %s159 = sphi 0, %s159
    %s161 = sphi 0, %s159
    %s162 = sphi 0, %s161
    %s176 = sphi 0, %s162
    %s180 = sphi 0, %s180
    %s182 = sphi 0, %s180
    %s183 = sphi 0, %s182
    %s197 = sphi 0, %s183
    %s201 = sphi 0, %s201
    %s203 = sphi 0, %s201
    %s204 = sphi 0, %s203
    %s218 = sphi 0, %s204
    %s222 = sphi 0, %s222
    %s224 = sphi 0, %s222
    %s225 = sphi 0, %s224
    %s239 = sphi 0, %s225
    %s243 = sphi 0, %s243
    %s245 = sphi 0, %s243
    %s246 = sphi 0, %s245
    %s260 = sphi 0, %s246
    %s264 = sphi 0, %s264
    %s266 = sphi 0, %s264
    %s267 = sphi 0, %s266
    %s281 = sphi 0, %s267
    %s287 = sphi 0, %s289
    %s290 = sphi 0, %s287
    %s291 = sphi 0, %s290
    %s307 = sphi 0, %s291
    %s313 = sphi 0, %s315
    %s316 = sphi 0, %s313
    %s317 = sphi 0, %s316
    %s333 = sphi 0, %s317
  $region4: #{self_match_net_forward.1} parent=0 // loop_header_branch
    %23 = sbr.rel (%p21) target = $region8
  $region5: #{self_match_net_forward.1} parent=0 // loop_body
    %s25 = ssub.s32 %s20, 1
    %s26 = ssub.s32 %s20, 2
    %s27 = sadd.s32 %s20, 1
    %s28 = ssub.s32 %s20, %s27
    %p29 = scmp.eq.s32.totalorder %s28, 0
    %s31 = sadd.s32 %s30, 1
    %s32 = scalar_select %p29, %s30, %s31
    %p35 = pneg %p29
    %p36 = scmp.eq.s32.totalorder %s20, 1
    %p37 = por %p35, %p36
    %p38 = scmp.ne.s32.totalorder %s30, %s33
    %p39 = scmp.eq.s32.totalorder %s20, 0
    %p40 = por %p38, %p39
    %p41 = scmp.ne.s32.totalorder %s30, %s33
    %p42 = scmp.eq.s32.totalorder %s25, 1
    %p43 = por %p41, %p42
    %p44 = scmp.ne.s32.totalorder %s33, %s34
    %p45 = scmp.eq.s32.totalorder %s25, 0
    %p46 = por %p44, %p45
    %p47 = scmp.ne.s32.totalorder %s33, %s34
    %p48 = scmp.eq.s32.totalorder %s26, 1
    %p49 = por %p47, %p48
    %p51 = scmp.ne.s32.totalorder %s34, %s50
    %p52 = scmp.eq.s32.totalorder %s26, 0
    %p53 = por %p51, %p52
    %s55 = sadd.s32 %s54, 1
    %p58 = scmp.eq.s32.totalorder %s20, 1
    %p59 = scmp.ne.s32.totalorder %s54, %s56
    %p60 = scmp.eq.s32.totalorder %s20, 0
    %p61 = por %p59, %p60
    %p62 = scmp.ne.s32.totalorder %s54, %s56
    %p63 = scmp.eq.s32.totalorder %s25, 1
    %p64 = por %p62, %p63
    %p65 = scmp.ne.s32.totalorder %s56, %s57
    %p66 = scmp.eq.s32.totalorder %s25, 0
    %p67 = por %p65, %p66
    %p68 = scmp.ne.s32.totalorder %s56, %s57
    %p69 = scmp.eq.s32.totalorder %s26, 1
    %p70 = por %p68, %p69
    %p72 = scmp.ne.s32.totalorder %s57, %s71
    %p73 = scmp.eq.s32.totalorder %s26, 0
    %p74 = por %p72, %p73
    %s76 = sadd.s32 %s75, 1
    %p79 = scmp.eq.s32.totalorder %s20, 1
    %p80 = scmp.ne.s32.totalorder %s75, %s77
    %p81 = scmp.eq.s32.totalorder %s20, 0
    %p82 = por %p80, %p81
    %p83 = scmp.ne.s32.totalorder %s75, %s77
    %p84 = scmp.eq.s32.totalorder %s25, 1
    %p85 = por %p83, %p84
    %p86 = scmp.ne.s32.totalorder %s77, %s78
    %p87 = scmp.eq.s32.totalorder %s25, 0
    %p88 = por %p86, %p87
    %p89 = scmp.ne.s32.totalorder %s77, %s78
    %p90 = scmp.eq.s32.totalorder %s26, 1
    %p91 = por %p89, %p90
    %p93 = scmp.ne.s32.totalorder %s78, %s92
    %p94 = scmp.eq.s32.totalorder %s26, 0
    %p95 = por %p93, %p94
    %s97 = sadd.s32 %s96, 1
    %p100 = scmp.eq.s32.totalorder %s20, 1
    %p101 = scmp.ne.s32.totalorder %s96, %s98
    %p102 = scmp.eq.s32.totalorder %s20, 0
    %p103 = por %p101, %p102
    %p104 = scmp.ne.s32.totalorder %s96, %s98
    %p105 = scmp.eq.s32.totalorder %s25, 1
    %p106 = por %p104, %p105
    %p107 = scmp.ne.s32.totalorder %s98, %s99
    %p108 = scmp.eq.s32.totalorder %s25, 0
    %p109 = por %p107, %p108
    %p110 = scmp.ne.s32.totalorder %s98, %s99
    %p111 = scmp.eq.s32.totalorder %s26, 1
    %p112 = por %p110, %p111
    %p114 = scmp.ne.s32.totalorder %s99, %s113
    %p115 = scmp.eq.s32.totalorder %s26, 0
    %p116 = por %p114, %p115
    %s118 = sadd.s32 %s117, 1
    %p121 = scmp.eq.s32.totalorder %s20, 1
    %p122 = scmp.ne.s32.totalorder %s117, %s119
    %p123 = scmp.eq.s32.totalorder %s20, 0
    %p124 = por %p122, %p123
    %p125 = scmp.ne.s32.totalorder %s117, %s119
    %p126 = scmp.eq.s32.totalorder %s25, 1
    %p127 = por %p125, %p126
    %p128 = scmp.ne.s32.totalorder %s119, %s120
    %p129 = scmp.eq.s32.totalorder %s25, 0
    %p130 = por %p128, %p129
    %p131 = scmp.ne.s32.totalorder %s119, %s120
    %p132 = scmp.eq.s32.totalorder %s26, 1
    %p133 = por %p131, %p132
    %p135 = scmp.ne.s32.totalorder %s120, %s134
    %p136 = scmp.eq.s32.totalorder %s26, 0
    %p137 = por %p135, %p136
    %s139 = sadd.s32 %s138, 1
    %p142 = scmp.eq.s32.totalorder %s20, 1
    %p143 = scmp.ne.s32.totalorder %s138, %s140
    %p144 = scmp.eq.s32.totalorder %s20, 0
    %p145 = por %p143, %p144
    %p146 = scmp.ne.s32.totalorder %s138, %s140
    %p147 = scmp.eq.s32.totalorder %s25, 1
    %p148 = por %p146, %p147
    %p149 = scmp.ne.s32.totalorder %s140, %s141
    %p150 = scmp.eq.s32.totalorder %s25, 0
    %p151 = por %p149, %p150
    %p152 = scmp.ne.s32.totalorder %s140, %s141
    %p153 = scmp.eq.s32.totalorder %s26, 1
    %p154 = por %p152, %p153
    %p156 = scmp.ne.s32.totalorder %s141, %s155
    %p157 = scmp.eq.s32.totalorder %s26, 0
    %p158 = por %p156, %p157
    %s160 = sadd.s32 %s159, 1
    %p163 = scmp.eq.s32.totalorder %s20, 1
    %p164 = scmp.ne.s32.totalorder %s159, %s161
    %p165 = scmp.eq.s32.totalorder %s20, 0
    %p166 = por %p164, %p165
    %p167 = scmp.ne.s32.totalorder %s159, %s161
    %p168 = scmp.eq.s32.totalorder %s25, 1
    %p169 = por %p167, %p168
    %p170 = scmp.ne.s32.totalorder %s161, %s162
    %p171 = scmp.eq.s32.totalorder %s25, 0
    %p172 = por %p170, %p171
    %p173 = scmp.ne.s32.totalorder %s161, %s162
    %p174 = scmp.eq.s32.totalorder %s26, 1
    %p175 = por %p173, %p174
    %p177 = scmp.ne.s32.totalorder %s162, %s176
    %p178 = scmp.eq.s32.totalorder %s26, 0
    %p179 = por %p177, %p178
    %s181 = sadd.s32 %s180, 1
    %p184 = scmp.eq.s32.totalorder %s20, 1
    %p185 = scmp.ne.s32.totalorder %s180, %s182
    %p186 = scmp.eq.s32.totalorder %s20, 0
    %p187 = por %p185, %p186
    %p188 = scmp.ne.s32.totalorder %s180, %s182
    %p189 = scmp.eq.s32.totalorder %s25, 1
    %p190 = por %p188, %p189
    %p191 = scmp.ne.s32.totalorder %s182, %s183
    %p192 = scmp.eq.s32.totalorder %s25, 0
    %p193 = por %p191, %p192
    %p194 = scmp.ne.s32.totalorder %s182, %s183
    %p195 = scmp.eq.s32.totalorder %s26, 1
    %p196 = por %p194, %p195
    %p198 = scmp.ne.s32.totalorder %s183, %s197
    %p199 = scmp.eq.s32.totalorder %s26, 0
    %p200 = por %p198, %p199
    %s202 = sadd.s32 %s201, 1
    %p205 = scmp.eq.s32.totalorder %s20, 1
    %p206 = scmp.ne.s32.totalorder %s201, %s203
    %p207 = scmp.eq.s32.totalorder %s20, 0
    %p208 = por %p206, %p207
    %p209 = scmp.ne.s32.totalorder %s201, %s203
    %p210 = scmp.eq.s32.totalorder %s25, 1
    %p211 = por %p209, %p210
    %p212 = scmp.ne.s32.totalorder %s203, %s204
    %p213 = scmp.eq.s32.totalorder %s25, 0
    %p214 = por %p212, %p213
    %p215 = scmp.ne.s32.totalorder %s203, %s204
    %p216 = scmp.eq.s32.totalorder %s26, 1
    %p217 = por %p215, %p216
    %p219 = scmp.ne.s32.totalorder %s204, %s218
    %p220 = scmp.eq.s32.totalorder %s26, 0
    %p221 = por %p219, %p220
    %s223 = sadd.s32 %s222, 1
    %p226 = scmp.eq.s32.totalorder %s20, 1
    %p227 = scmp.ne.s32.totalorder %s222, %s224
    %p228 = scmp.eq.s32.totalorder %s20, 0
    %p229 = por %p227, %p228
    %p230 = scmp.ne.s32.totalorder %s222, %s224
    %p231 = scmp.eq.s32.totalorder %s25, 1
    %p232 = por %p230, %p231
    %p233 = scmp.ne.s32.totalorder %s224, %s225
    %p234 = scmp.eq.s32.totalorder %s25, 0
    %p235 = por %p233, %p234
    %p236 = scmp.ne.s32.totalorder %s224, %s225
    %p237 = scmp.eq.s32.totalorder %s26, 1
    %p238 = por %p236, %p237
    %p240 = scmp.ne.s32.totalorder %s225, %s239
    %p241 = scmp.eq.s32.totalorder %s26, 0
    %p242 = por %p240, %p241
    %s244 = sadd.s32 %s243, 1
    %p247 = scmp.eq.s32.totalorder %s20, 1
    %p248 = scmp.ne.s32.totalorder %s243, %s245
    %p249 = scmp.eq.s32.totalorder %s20, 0
    %p250 = por %p248, %p249
    %p251 = scmp.ne.s32.totalorder %s243, %s245
    %p252 = scmp.eq.s32.totalorder %s25, 1
    %p253 = por %p251, %p252
    %p254 = scmp.ne.s32.totalorder %s245, %s246
    %p255 = scmp.eq.s32.totalorder %s25, 0
    %p256 = por %p254, %p255
    %p257 = scmp.ne.s32.totalorder %s245, %s246
    %p258 = scmp.eq.s32.totalorder %s26, 1
    %p259 = por %p257, %p258
    %p261 = scmp.ne.s32.totalorder %s246, %s260
    %p262 = scmp.eq.s32.totalorder %s26, 0
    %p263 = por %p261, %p262
    %s265 = sadd.s32 %s264, 1
    %p268 = scmp.eq.s32.totalorder %s20, 1
    %p269 = scmp.ne.s32.totalorder %s264, %s266
    %p270 = scmp.eq.s32.totalorder %s20, 0
    %p271 = por %p269, %p270
    %p272 = scmp.ne.s32.totalorder %s264, %s266
    %p273 = scmp.eq.s32.totalorder %s25, 1
    %p274 = por %p272, %p273
    %p275 = scmp.ne.s32.totalorder %s266, %s267
    %p276 = scmp.eq.s32.totalorder %s25, 0
    %p277 = por %p275, %p276
    %p278 = scmp.ne.s32.totalorder %s266, %s267
    %p279 = scmp.eq.s32.totalorder %s26, 1
    %p280 = por %p278, %p279
    %p282 = scmp.ne.s32.totalorder %s267, %s281
    %p283 = scmp.eq.s32.totalorder %s26, 0
    %p284 = por %p282, %p283
    %s285 = ssub.s32 %s20, %s27
    %p286 = scmp.eq.s32.totalorder %s285, 0
    %s288 = sadd.s32 %s287, 1
    %s289 = scalar_select %p286, %s287, %s288
    %p292 = pneg %p286
    %p293 = scmp.eq.s32.totalorder %s20, 1
    %p294 = por %p292, %p293
    %p295 = scmp.ne.s32.totalorder %s287, %s290
    %p296 = scmp.eq.s32.totalorder %s20, 0
    %p297 = por %p295, %p296
    %p298 = scmp.ne.s32.totalorder %s287, %s290
    %p299 = scmp.eq.s32.totalorder %s25, 1
    %p300 = por %p298, %p299
    %p301 = scmp.ne.s32.totalorder %s290, %s291
    %p302 = scmp.eq.s32.totalorder %s25, 0
    %p303 = por %p301, %p302
    %p304 = scmp.ne.s32.totalorder %s290, %s291
    %p305 = scmp.eq.s32.totalorder %s26, 1
    %p306 = por %p304, %p305
    %p308 = scmp.ne.s32.totalorder %s291, %s307
    %p309 = scmp.eq.s32.totalorder %s26, 0
    %p310 = por %p308, %p309
    %s311 = ssub.s32 %s20, %s27
    %p312 = scmp.eq.s32.totalorder %s311, 0
    %s314 = sadd.s32 %s313, 1
    %s315 = scalar_select %p312, %s313, %s314
    %p318 = pneg %p312
    %p319 = scmp.eq.s32.totalorder %s20, 1
    %p320 = por %p318, %p319
    %p321 = scmp.ne.s32.totalorder %s313, %s316
    %p322 = scmp.eq.s32.totalorder %s20, 0
    %p323 = por %p321, %p322
    %p324 = scmp.ne.s32.totalorder %s313, %s316
    %p325 = scmp.eq.s32.totalorder %s25, 1
    %p326 = por %p324, %p325
    %p327 = scmp.ne.s32.totalorder %s316, %s317
    %p328 = scmp.eq.s32.totalorder %s25, 0
    %p329 = por %p327, %p328
    %p330 = scmp.ne.s32.totalorder %s316, %s317
    %p331 = scmp.eq.s32.totalorder %s26, 1
    %p332 = por %p330, %p331
    %p334 = scmp.ne.s32.totalorder %s317, %s333
    %p335 = scmp.eq.s32.totalorder %s26, 0
    %p336 = por %p334, %p335
    %p337 = scmp.le.s32.totalorder 1, %s20
    %p338 = scmp.lt.s32.totalorder %s20, 3
    %p339 = pnand %p337, %p338
    %p340 = pneg %p339
    // Predicated region
    $region9: #{self_match_net_forward.1} parent=5 // pred_check
      _
    $region10: #{self_match_net_forward.1} parent=5 // pred_check_branch
      %342 = sbr.rel (%p339) target = $region12
    $region11: #{self_match_net_forward.1} parent=5 // pred_region
      %s343 = ssub.s32 %s20, 1
      // Predicated region
      $region13: #{self_match_net_forward.1} parent=11 // pred_check
        %p344 = pneg %p67
      $region14: #{self_match_net_forward.1} parent=11 // pred_check_branch
        %346 = sbr.rel (%p344) target = $region16
      $region15: #{self_match_net_forward.1} parent=11 // pred_region
        _
      $region16: #{self_match_net_forward.1} parent=11 // pred_fallthru
        _
      // Predicated region
      $region17: #{self_match_net_forward.1} parent=11 // pred_check
        %p347 = pneg %p88
      $region18: #{self_match_net_forward.1} parent=11 // pred_check_branch
        %349 = sbr.rel (%p347) target = $region20
      $region19: #{self_match_net_forward.1} parent=11 // pred_region
        _
      $region20: #{self_match_net_forward.1} parent=11 // pred_fallthru
        _
      // Predicated region
      $region21: #{self_match_net_forward.1} parent=11 // pred_check
        %p350 = pneg %p109
      $region22: #{self_match_net_forward.1} parent=11 // pred_check_branch
        %352 = sbr.rel (%p350) target = $region24
      $region23: #{self_match_net_forward.1} parent=11 // pred_region
        _
      $region24: #{self_match_net_forward.1} parent=11 // pred_fallthru
        _
      // Predicated region
      $region25: #{self_match_net_forward.1} parent=11 // pred_check
        %p353 = pneg %p130
      $region26: #{self_match_net_forward.1} parent=11 // pred_check_branch
        %355 = sbr.rel (%p353) target = $region28
      $region27: #{self_match_net_forward.1} parent=11 // pred_region
        _
      $region28: #{self_match_net_forward.1} parent=11 // pred_fallthru
        _
      // Predicated region
      $region29: #{self_match_net_forward.1} parent=11 // pred_check
        %p356 = pneg %p151
      $region30: #{self_match_net_forward.1} parent=11 // pred_check_branch
        %358 = sbr.rel (%p356) target = $region32
      $region31: #{self_match_net_forward.1} parent=11 // pred_region
        _
      $region32: #{self_match_net_forward.1} parent=11 // pred_fallthru
        _
      // Predicated region
      $region33: #{self_match_net_forward.1} parent=11 // pred_check
        %p359 = pneg %p172
      $region34: #{self_match_net_forward.1} parent=11 // pred_check_branch
        %361 = sbr.rel (%p359) target = $region36
      $region35: #{self_match_net_forward.1} parent=11 // pred_region
        _
      $region36: #{self_match_net_forward.1} parent=11 // pred_fallthru
        _
      // Predicated region
      $region37: #{self_match_net_forward.1} parent=11 // pred_check
        %p362 = pneg %p193
      $region38: #{self_match_net_forward.1} parent=11 // pred_check_branch
        %364 = sbr.rel (%p362) target = $region40
      $region39: #{self_match_net_forward.1} parent=11 // pred_region
        _
      $region40: #{self_match_net_forward.1} parent=11 // pred_fallthru
        _
      // Predicated region
      $region41: #{self_match_net_forward.1} parent=11 // pred_check
        %p365 = pneg %p214
      $region42: #{self_match_net_forward.1} parent=11 // pred_check_branch
        %367 = sbr.rel (%p365) target = $region44
      $region43: #{self_match_net_forward.1} parent=11 // pred_region
        _
      $region44: #{self_match_net_forward.1} parent=11 // pred_fallthru
        _
      // Predicated region
      $region45: #{self_match_net_forward.1} parent=11 // pred_check
        %p368 = pneg %p235
      $region46: #{self_match_net_forward.1} parent=11 // pred_check_branch
        %370 = sbr.rel (%p368) target = $region48
      $region47: #{self_match_net_forward.1} parent=11 // pred_region
        _
      $region48: #{self_match_net_forward.1} parent=11 // pred_fallthru
        _
      // Predicated region
      $region49: #{self_match_net_forward.1} parent=11 // pred_check
        %p371 = pneg %p256
      $region50: #{self_match_net_forward.1} parent=11 // pred_check_branch
        %373 = sbr.rel (%p371) target = $region52
      $region51: #{self_match_net_forward.1} parent=11 // pred_region
        _
      $region52: #{self_match_net_forward.1} parent=11 // pred_fallthru
        _
      // Predicated region
      $region53: #{self_match_net_forward.1} parent=11 // pred_check
        %p374 = pneg %p277
      $region54: #{self_match_net_forward.1} parent=11 // pred_check_branch
        %376 = sbr.rel (%p374) target = $region56
      $region55: #{self_match_net_forward.1} parent=11 // pred_region
        _
      $region56: #{self_match_net_forward.1} parent=11 // pred_fallthru
        _
    $region12: #{self_match_net_forward.1} parent=5 // pred_fallthru
      _
    %p377 = scmp.lt.s32.totalorder %s20, 2
    // Predicated region
    $region57: #{self_match_net_forward.1} parent=5 // pred_check
      %p378 = pneg %p377
    $region58: #{self_match_net_forward.1} parent=5 // pred_check_branch
      %380 = sbr.rel (%p378) target = $region60
    $region59: #{self_match_net_forward.1} parent=5 // pred_region
      // Predicated region
      $region61: #{self_match_net_forward.1} parent=59 // pred_check
        %p381 = pneg %p40
      $region62: #{self_match_net_forward.1} parent=59 // pred_check_branch
        %383 = sbr.rel (%p381) target = $region64
      $region63: #{self_match_net_forward.1} parent=59 // pred_region
        %p384 = scmp.lt.s32.totalorder %s20, 1
        %s385 = scalar_select %p384, %s20, 1
        %s386 = smul.addr %s385, 8
        %s387 = smul.addr %s386, 8
        %s388 = scalar_lea.vmem %s0, %s387
      $region64: #{self_match_net_forward.1} parent=59 // pred_fallthru
        _
    $region60: #{self_match_net_forward.1} parent=5 // pred_fallthru
      _
    %p389 = scmp.le.s32.totalorder 1, %s20
    %p390 = scmp.lt.s32.totalorder %s20, 3
    %p391 = pnand %p389, %p390
    %p392 = pneg %p391
    // Predicated region
    $region65: #{self_match_net_forward.1} parent=5 // pred_check
      _
    $region66: #{self_match_net_forward.1} parent=5 // pred_check_branch
      %394 = sbr.rel (%p391) target = $region68
    $region67: #{self_match_net_forward.1} parent=5 // pred_region
      %s395 = ssub.s32 %s20, 1
      %p396 = scmp.lt.s32.totalorder %s25, 1
      %s397 = scalar_select %p396, %s25, 1
      %s398 = smul.addr %s397, 8
      %s399 = smul.addr %s398, 8
      %s400 = scalar_lea.vmem %s0, %s399
      %p401 = pneg %p46
      %p402 = pneg %p43
      %p403 = pneg %p67
      %p404 = pneg %p64
      %p405 = pneg %p88
      %p406 = pneg %p85
      %p407 = pneg %p109
      %p408 = pneg %p106
      %p409 = pneg %p130
      %p410 = pneg %p127
      %p411 = pneg %p151
      %p412 = pneg %p148
      %p413 = pneg %p172
      %p414 = pneg %p169
      %p415 = pneg %p193
      %p416 = pneg %p190
      %p417 = pneg %p214
      %p418 = pneg %p211
      %p419 = pneg %p235
      %p420 = pneg %p232
      %p421 = pneg %p256
      %p422 = pneg %p253
      %p423 = pneg %p277
      %p424 = pneg %p274
      %p425 = pneg %p303
      %p426 = pneg %p300
      %p427 = scmp.lt.s32.totalorder %s25, 1
      %s428 = scalar_select %p427, %s25, 1
      %s429 = smul.addr %s428, 8
      %s430 = scalar_lea.vmem %s12, %s429
      %p431 = pneg %p329
      %p432 = pneg %p326
      %p433 = scmp.lt.s32.totalorder %s25, 1
      %s434 = scalar_select %p433, %s25, 1
      %s435 = smul.addr %s434, 2
      %s436 = scalar_lea.vmem %s13, %s435
      %p437 = scmp.lt.s32.totalorder %s25, 1
      %s438 = scalar_select %p437, %s25, 1
      %s439 = smul.addr %s438, 8
      %s440 = smul.addr %s439, 8
      %s441 = scalar_lea.vmem %s0, %s440
      %p442 = scmp.lt.s32.totalorder %s25, 1
      %s443 = scalar_select %p442, %s25, 1
      %s444 = smul.addr %s443, 8
      %s445 = scalar_lea.vmem %s12, %s444
      %p446 = scmp.lt.s32.totalorder %s25, 1
      %s447 = scalar_select %p446, %s25, 1
      %s448 = smul.addr %s447, 2
      %s449 = scalar_lea.vmem %s13, %s448
      %v450 = vld [vmem:[%s441] sm:$0xff]
      %v451 = vld [vmem:[%s441 + $0x8] sm:$0xff]
      %v452 = vld [vmem:[%s441 + $0x10] sm:$0xff]
      %v453 = vld [vmem:[%s441 + $0x18] sm:$0xff]
      %v454 = vld [vmem:[%s441 + $0x20] sm:$0xff]
      %v455 = vld [vmem:[%s441 + $0x28] sm:$0xff]
      %v456 = vld [vmem:[%s441 + $0x30] sm:$0xff]
      %v457 = vld [vmem:[%s441 + $0x38] sm:$0xff]
      %v458 = vld [vmem:[%s1] sm:$0xff]
      %v459 = vld [vmem:[%s1 + $0x8] sm:$0xff]
      %v460 = vld [vmem:[%s1 + $0x10] sm:$0xff]
      %v461 = vld [vmem:[%s1 + $0x18] sm:$0xff]
      %v462 = vld [vmem:[%s1 + $0x20] sm:$0xff]
      %v463 = vld [vmem:[%s1 + $0x28] sm:$0xff]
      %v464 = vld [vmem:[%s1 + $0x30] sm:$0xff]
      %v465 = vld [vmem:[%s1 + $0x38] sm:$0xff]
      %v466 = vld [vmem:[%s1 + $0x40] sm:$0xff]
      %v467 = vld [vmem:[%s1 + $0x48] sm:$0xff]
      %v468 = vld [vmem:[%s1 + $0x50] sm:$0xff]
      %v469 = vld [vmem:[%s1 + $0x58] sm:$0xff]
      %v470 = vld [vmem:[%s1 + $0x60] sm:$0xff]
      %v471 = vld [vmem:[%s1 + $0x68] sm:$0xff]
      %v472 = vld [vmem:[%s1 + $0x70] sm:$0xff]
      %v473 = vld [vmem:[%s1 + $0x78] sm:$0xff]
      %v474 = vld [vmem:[%s1 + $0x80] sm:$0xff]
      %v475 = vld [vmem:[%s1 + $0x88] sm:$0xff]
      %v476 = vld [vmem:[%s1 + $0x90] sm:$0xff]
      %v477 = vld [vmem:[%s1 + $0x98] sm:$0xff]
      %v478 = vld [vmem:[%s1 + $0xa0] sm:$0xff]
      %v479 = vld [vmem:[%s1 + $0xa8] sm:$0xff]
      %v480 = vld [vmem:[%s1 + $0xb0] sm:$0xff]
      %v481 = vld [vmem:[%s1 + $0xb8] sm:$0xff]
      %v482 = vld [vmem:[%s1 + $0xc0] sm:$0xff]
      %v483 = vld [vmem:[%s1 + $0xc8] sm:$0xff]
      %v484 = vld [vmem:[%s1 + $0xd0] sm:$0xff]
      %v485 = vld [vmem:[%s1 + $0xd8] sm:$0xff]
      %v486 = vld [vmem:[%s1 + $0xe0] sm:$0xff]
      %v487 = vld [vmem:[%s1 + $0xe8] sm:$0xff]
      %v488 = vld [vmem:[%s1 + $0xf0] sm:$0xff]
      %v489 = vld [vmem:[%s1 + $0xf8] sm:$0xff]
      %490 = vmatprep.subr.mxu0 0.0
      %491 = vmatpush1.msra.mxu0 %v458
      %492 = vmatprep.subr.mxu0 0.0
      %493 = vmatpush1.msra.mxu0 %v459
      %494 = vmatprep.subr.mxu0 0.0
      %495 = vmatpush1.msra.mxu0 %v460
      %496 = vmatprep.subr.mxu0 0.0
      %497 = vmatpush1.msra.mxu0 %v461
      %498 = vmatprep.subr.mxu0 0.0
      %499 = vmatpush1.msra.mxu0 %v462
      %500 = vmatprep.subr.mxu0 0.0
      %501 = vmatpush1.msra.mxu0 %v463
      %502 = vmatprep.subr.mxu0 0.0
      %503 = vmatpush1.msra.mxu0 %v464
      %504 = vmatprep.subr.mxu0 0.0
      %505 = vmatpush1.msra.mxu0 %v465
      %506 = vmatprep.subr.mxu0 0.0
      %507 = vmatpush1.msra.mxu0 %v466
      %508 = vmatprep.subr.mxu0 0.0
      %509 = vmatpush1.msra.mxu0 %v467
      %510 = vmatprep.subr.mxu0 0.0
      %511 = vmatpush1.msra.mxu0 %v468
      %512 = vmatprep.subr.mxu0 0.0
      %513 = vmatpush1.msra.mxu0 %v469
      %514 = vmatprep.subr.mxu0 0.0
      %515 = vmatpush1.msra.mxu0 %v470
      %516 = vmatprep.subr.mxu0 0.0
      %517 = vmatpush1.msra.mxu0 %v471
      %518 = vmatprep.subr.mxu0 0.0
      %519 = vmatpush1.msra.mxu0 %v472
      %520 = vmatprep.subr.mxu0 0.0
      %521 = vmatpush1.msra.mxu0 %v473
      %522 = vmatprep.subr.mxu0 0.0
      %523 = vmatpush1.msra.mxu0 %v474
      %524 = vmatprep.subr.mxu0 0.0
      %525 = vmatpush1.msra.mxu0 %v475
      %526 = vmatprep.subr.mxu0 0.0
      %527 = vmatpush1.msra.mxu0 %v476
      %528 = vmatprep.subr.mxu0 0.0
      %529 = vmatpush1.msra.mxu0 %v477
      %530 = vmatprep.subr.mxu0 0.0
      %531 = vmatpush1.msra.mxu0 %v478
      %532 = vmatprep.subr.mxu0 0.0
      %533 = vmatpush1.msra.mxu0 %v479
      %534 = vmatprep.subr.mxu0 0.0
      %535 = vmatpush1.msra.mxu0 %v480
      %536 = vmatprep.subr.mxu0 0.0
      %537 = vmatpush1.msra.mxu0 %v481
      %538 = vmatprep.subr.mxu0 0.0
      %539 = vmatpush1.msra.mxu0 %v482
      %540 = vmatprep.subr.mxu0 0.0
      %541 = vmatpush1.msra.mxu0 %v483
      %542 = vmatprep.subr.mxu0 0.0
      %543 = vmatpush1.msra.mxu0 %v484
      %544 = vmatprep.subr.mxu0 0.0
      %545 = vmatpush1.msra.mxu0 %v485
      %546 = vmatprep.subr.mxu0 0.0
      %547 = vmatpush1.msra.mxu0 %v486
      %548 = vmatprep.subr.mxu0 0.0
      %549 = vmatpush1.msra.mxu0 %v487
      %550 = vmatprep.subr.mxu0 0.0
      %551 = vmatpush1.msra.mxu0 %v488
      %552 = vmatprep.subr.mxu0 0.0
      %553 = vmatpush1.msra.mxu0 %v489
      %554 = vmatprep.mubr.f32.mxu0 %v451
      %555 = vmatmul.mubr.f32.gmra.mrb[0].mxu0 %v450
      %v556 = vpop.f32.mrb[0].mxu0
      %v557 = vadd.f32 0.0, %v556
      %v558 = vpop.f32.mrb[0].mxu0
      %559 = vmatprep.mubr.f32.mxu0 %v453
      %560 = vmatmul.mubr.f32.gmra.mrb[0].mxu0 %v452
      %v561 = vpop.f32.mrb[0].mxu0
      %v562 = vadd.f32 0.0, %v561
      %v563 = vpop.f32.mrb[0].mxu0
      %564 = vmatprep.mubr.f32.mxu0 %v455
      %565 = vmatmul.mubr.f32.gmra.mrb[0].mxu0 %v454
      %v566 = vpop.f32.mrb[0].mxu0
      %v567 = vadd.f32 0.0, %v566
      %v568 = vpop.f32.mrb[0].mxu0
      %569 = vmatprep.mubr.f32.mxu0 %v457
      %570 = vmatmul.mubr.f32.gmra.mrb[0].mxu0 %v456
      %v571 = vpop.f32.mrb[0].mxu0
      %v572 = vadd.f32 0.0, %v571
      %v573 = vpop.f32.mrb[0].mxu0
      %574 = vdwg.mxu0
      %v575 = vld [vmem:[%s2] sm:$0x1f]
      %s576 = scalar_lea.vmem %s2, 8
      %v577 = vld [vmem:[%s576] sm:$0x1f]
      %582 = vrot.lane.b32.xlu0 %v557, 127
      %v583 = vpop.permute.xlu0 %582
      %584 = vrot.lane.b32.xlu0 %v562, 127
      %v585 = vpop.permute.xlu0 %584
      %586 = vrot.lane.b32.xlu0 %v567, 127
      %v587 = vpop.permute.xlu0 %586
      %588 = vrot.lane.b32.xlu0 %v572, 127
      %v589 = vpop.permute.xlu0 %588
      %vm594 = vcmask 261120
      %v596 = vsel %vm594, %v577, 0
      %598 = vmatprep.subr.mxu0 0.0
      %599 = vmatpush1.msra.mxu0 %v583
      %600 = vmatprep.subr.mxu0 0.0
      %601 = vmatpush1.msra.mxu0 %v585
      %602 = vmatprep.subr.mxu0 0.0
      %603 = vmatpush1.msra.mxu0 %v587
      %604 = vmatprep.subr.mxu0 0.0
      %605 = vmatpush1.msra.mxu0 %v589
      %606 = vmatprep.subr.mxu0 0.0
      %607 = vmatpush1.msra.mxu0 0.0
      %608 = vmatprep.subr.mxu0 0.0
      %609 = vmatpush1.msra.mxu0 0.0
      %610 = vmatprep.subr.mxu0 0.0
      %611 = vmatpush1.msra.mxu0 0.0
      %612 = vmatprep.subr.mxu0 0.0
      %613 = vmatpush1.msra.mxu0 0.0
      %614 = vmatprep.subr.mxu0 0.0
      %615 = vmatpush1.msra.mxu0 0.0
      %616 = vmatprep.subr.mxu0 0.0
      %617 = vmatpush1.msra.mxu0 0.0
      %618 = vmatprep.subr.mxu0 0.0
      %619 = vmatpush1.msra.mxu0 0.0
      %620 = vmatprep.subr.mxu0 0.0
      %621 = vmatpush1.msra.mxu0 0.0
      %622 = vmatprep.subr.mxu0 0.0
      %623 = vmatpush1.msra.mxu0 0.0
      %624 = vmatprep.subr.mxu0 0.0
      %625 = vmatpush1.msra.mxu0 0.0
      %626 = vmatprep.subr.mxu0 0.0
      %627 = vmatpush1.msra.mxu0 0.0
      %628 = vmatprep.subr.mxu0 0.0
      %629 = vmatpush1.msra.mxu0 0.0
      %630 = vmatprep.subr.mxu0 0.0
      %631 = vmatpush1.msra.mxu0 0.0
      %632 = vmatprep.subr.mxu0 0.0
      %633 = vmatpush1.msra.mxu0 0.0
      %634 = vmatprep.subr.mxu0 0.0
      %635 = vmatpush1.msra.mxu0 0.0
      %636 = vmatprep.subr.mxu0 0.0
      %637 = vmatpush1.msra.mxu0 0.0
      %638 = vmatprep.subr.mxu0 0.0
      %639 = vmatpush1.msra.mxu0 0.0
      %640 = vmatprep.subr.mxu0 0.0
      %641 = vmatpush1.msra.mxu0 0.0
      %642 = vmatprep.subr.mxu0 0.0
      %643 = vmatpush1.msra.mxu0 0.0
      %644 = vmatprep.subr.mxu0 0.0
      %645 = vmatpush1.msra.mxu0 0.0
      %646 = vmatprep.subr.mxu0 0.0
      %647 = vmatpush1.msra.mxu0 0.0
      %648 = vmatprep.subr.mxu0 0.0
      %649 = vmatpush1.msra.mxu0 0.0
      %650 = vmatprep.subr.mxu0 0.0
      %651 = vmatpush1.msra.mxu0 0.0
      %652 = vmatprep.subr.mxu0 0.0
      %653 = vmatpush1.msra.mxu0 0.0
      %654 = vmatprep.subr.mxu0 0.0
      %655 = vmatpush1.msra.mxu0 0.0
      %656 = vmatprep.subr.mxu0 0.0
      %657 = vmatpush1.msra.mxu0 0.0
      %658 = vmatprep.subr.mxu0 0.0
      %659 = vmatpush1.msra.mxu0 0.0
      %660 = vmatprep.subr.mxu0 0.0
      %661 = vmatpush1.msra.mxu0 0.0
      %662 = vmatprep.mubr.f32.mxu0 0.0
      %663 = vmatmul.mubr.f32.gmra.mrb[0].mxu0 %v596
      %v664 = vpop.f32.mrb[0].mxu0
      %v665 = vadd.f32 0.0, %v664
      %v666 = vpop.f32.mrb[0].mxu0
      %667 = vdwg.mxu0
      %v669 = vsel %vm594, %v575, 0
      %671 = vmatprep.subr.mxu0 0.0
      %672 = vmatpush1.msra.mxu0 %v557
      %673 = vmatprep.subr.mxu0 0.0
      %674 = vmatpush1.msra.mxu0 %v562
      %675 = vmatprep.subr.mxu0 0.0
      %676 = vmatpush1.msra.mxu0 %v567
      %677 = vmatprep.subr.mxu0 0.0
      %678 = vmatpush1.msra.mxu0 %v572
      %679 = vmatprep.subr.mxu0 0.0
      %680 = vmatpush1.msra.mxu0 0.0
      %681 = vmatprep.subr.mxu0 0.0
      %682 = vmatpush1.msra.mxu0 0.0
      %683 = vmatprep.subr.mxu0 0.0
      %684 = vmatpush1.msra.mxu0 0.0
      %685 = vmatprep.subr.mxu0 0.0
      %686 = vmatpush1.msra.mxu0 0.0
      %687 = vmatprep.subr.mxu0 0.0
      %688 = vmatpush1.msra.mxu0 0.0
      %689 = vmatprep.subr.mxu0 0.0
      %690 = vmatpush1.msra.mxu0 0.0
      %691 = vmatprep.subr.mxu0 0.0
      %692 = vmatpush1.msra.mxu0 0.0
      %693 = vmatprep.subr.mxu0 0.0
      %694 = vmatpush1.msra.mxu0 0.0
      %695 = vmatprep.subr.mxu0 0.0
      %696 = vmatpush1.msra.mxu0 0.0
      %697 = vmatprep.subr.mxu0 0.0
      %698 = vmatpush1.msra.mxu0 0.0
      %699 = vmatprep.subr.mxu0 0.0
      %700 = vmatpush1.msra.mxu0 0.0
      %701 = vmatprep.subr.mxu0 0.0
      %702 = vmatpush1.msra.mxu0 0.0
      %703 = vmatprep.subr.mxu0 0.0
      %704 = vmatpush1.msra.mxu0 0.0
      %705 = vmatprep.subr.mxu0 0.0
      %706 = vmatpush1.msra.mxu0 0.0
      %707 = vmatprep.subr.mxu0 0.0
      %708 = vmatpush1.msra.mxu0 0.0
      %709 = vmatprep.subr.mxu0 0.0
      %710 = vmatpush1.msra.mxu0 0.0
      %711 = vmatprep.subr.mxu0 0.0
      %712 = vmatpush1.msra.mxu0 0.0
      %713 = vmatprep.subr.mxu0 0.0
      %714 = vmatpush1.msra.mxu0 0.0
      %715 = vmatprep.subr.mxu0 0.0
      %716 = vmatpush1.msra.mxu0 0.0
      %717 = vmatprep.subr.mxu0 0.0
      %718 = vmatpush1.msra.mxu0 0.0
      %719 = vmatprep.subr.mxu0 0.0
      %720 = vmatpush1.msra.mxu0 0.0
      %721 = vmatprep.subr.mxu0 0.0
      %722 = vmatpush1.msra.mxu0 0.0
      %723 = vmatprep.subr.mxu0 0.0
      %724 = vmatpush1.msra.mxu0 0.0
      %725 = vmatprep.subr.mxu0 0.0
      %726 = vmatpush1.msra.mxu0 0.0
      %727 = vmatprep.subr.mxu0 0.0
      %728 = vmatpush1.msra.mxu0 0.0
      %729 = vmatprep.subr.mxu0 0.0
      %730 = vmatpush1.msra.mxu0 0.0
      %731 = vmatprep.subr.mxu0 0.0
      %732 = vmatpush1.msra.mxu0 0.0
      %733 = vmatprep.subr.mxu0 0.0
      %734 = vmatpush1.msra.mxu0 0.0
      %735 = vmatprep.mubr.f32.mxu0 0.0
      %736 = vmatmul.mubr.f32.gmra.mrb[0].mxu0 %v669
      %v737 = vpop.f32.mrb[0].mxu0
      %v738 = vadd.f32 %v665, %v737
      %v739 = vpop.f32.mrb[0].mxu0
      %740 = vdwg.mxu0
      %s741 = scalar_lea.vmem %s2, 16
      %v742 = vld [vmem:[%s741] sm:$0x1f]
      %743 = vrot.lane.b32.xlu0 %v557, 126
      %v744 = vpop.permute.xlu0 %743
      %745 = vrot.lane.b32.xlu0 %v562, 126
      %v746 = vpop.permute.xlu0 %745
      %747 = vrot.lane.b32.xlu0 %v567, 126
      %v748 = vpop.permute.xlu0 %747
      %749 = vrot.lane.b32.xlu0 %v572, 126
      %v750 = vpop.permute.xlu0 %749
      %v756 = vsel %vm594, %v742, 0
      %758 = vmatprep.subr.mxu0 0.0
      %759 = vmatpush1.msra.mxu0 %v744
      %760 = vmatprep.subr.mxu0 0.0
      %761 = vmatpush1.msra.mxu0 %v746
      %762 = vmatprep.subr.mxu0 0.0
      %763 = vmatpush1.msra.mxu0 %v748
      %764 = vmatprep.subr.mxu0 0.0
      %765 = vmatpush1.msra.mxu0 %v750
      %766 = vmatprep.subr.mxu0 0.0
      %767 = vmatpush1.msra.mxu0 0.0
      %768 = vmatprep.subr.mxu0 0.0
      %769 = vmatpush1.msra.mxu0 0.0
      %770 = vmatprep.subr.mxu0 0.0
      %771 = vmatpush1.msra.mxu0 0.0
      %772 = vmatprep.subr.mxu0 0.0
      %773 = vmatpush1.msra.mxu0 0.0
      %774 = vmatprep.subr.mxu0 0.0
      %775 = vmatpush1.msra.mxu0 0.0
      %776 = vmatprep.subr.mxu0 0.0
      %777 = vmatpush1.msra.mxu0 0.0
      %778 = vmatprep.subr.mxu0 0.0
      %779 = vmatpush1.msra.mxu0 0.0
      %780 = vmatprep.subr.mxu0 0.0
      %781 = vmatpush1.msra.mxu0 0.0
      %782 = vmatprep.subr.mxu0 0.0
      %783 = vmatpush1.msra.mxu0 0.0
      %784 = vmatprep.subr.mxu0 0.0
      %785 = vmatpush1.msra.mxu0 0.0
      %786 = vmatprep.subr.mxu0 0.0
      %787 = vmatpush1.msra.mxu0 0.0
      %788 = vmatprep.subr.mxu0 0.0
      %789 = vmatpush1.msra.mxu0 0.0
      %790 = vmatprep.subr.mxu0 0.0
      %791 = vmatpush1.msra.mxu0 0.0
      %792 = vmatprep.subr.mxu0 0.0
      %793 = vmatpush1.msra.mxu0 0.0
      %794 = vmatprep.subr.mxu0 0.0
      %795 = vmatpush1.msra.mxu0 0.0
      %796 = vmatprep.subr.mxu0 0.0
      %797 = vmatpush1.msra.mxu0 0.0
      %798 = vmatprep.subr.mxu0 0.0
      %799 = vmatpush1.msra.mxu0 0.0
      %800 = vmatprep.subr.mxu0 0.0
      %801 = vmatpush1.msra.mxu0 0.0
      %802 = vmatprep.subr.mxu0 0.0
      %803 = vmatpush1.msra.mxu0 0.0
      %804 = vmatprep.subr.mxu0 0.0
      %805 = vmatpush1.msra.mxu0 0.0
      %806 = vmatprep.subr.mxu0 0.0
      %807 = vmatpush1.msra.mxu0 0.0
      %808 = vmatprep.subr.mxu0 0.0
      %809 = vmatpush1.msra.mxu0 0.0
      %810 = vmatprep.subr.mxu0 0.0
      %811 = vmatpush1.msra.mxu0 0.0
      %812 = vmatprep.subr.mxu0 0.0
      %813 = vmatpush1.msra.mxu0 0.0
      %814 = vmatprep.subr.mxu0 0.0
      %815 = vmatpush1.msra.mxu0 0.0
      %816 = vmatprep.subr.mxu0 0.0
      %817 = vmatpush1.msra.mxu0 0.0
      %818 = vmatprep.subr.mxu0 0.0
      %819 = vmatpush1.msra.mxu0 0.0
      %820 = vmatprep.subr.mxu0 0.0
      %821 = vmatpush1.msra.mxu0 0.0
      %822 = vmatprep.mubr.f32.mxu0 0.0
      %823 = vmatmul.mubr.f32.gmra.mrb[0].mxu0 %v756
      %v824 = vpop.f32.mrb[0].mxu0
      %v825 = vadd.f32 0.0, %v824
      %v826 = vpop.f32.mrb[0].mxu0
      %827 = vdwg.mxu0
      %v828 = vadd.f32 %v738, %v825
      %s829 = scalar_lea.vmem %s2, 24
      %v830 = vld [vmem:[%s829] sm:$0x1f]
      %831 = vrot.lane.b32.xlu0 %v557, 125
      %v832 = vpop.permute.xlu0 %831
      %833 = vrot.lane.b32.xlu0 %v562, 125
      %v834 = vpop.permute.xlu0 %833
      %835 = vrot.lane.b32.xlu0 %v567, 125
      %v836 = vpop.permute.xlu0 %835
      %837 = vrot.lane.b32.xlu0 %v572, 125
      %v838 = vpop.permute.xlu0 %837
      %v844 = vsel %vm594, %v830, 0
      %846 = vmatprep.subr.mxu0 0.0
      %847 = vmatpush1.msra.mxu0 %v832
      %848 = vmatprep.subr.mxu0 0.0
      %849 = vmatpush1.msra.mxu0 %v834
      %850 = vmatprep.subr.mxu0 0.0
      %851 = vmatpush1.msra.mxu0 %v836
      %852 = vmatprep.subr.mxu0 0.0
      %853 = vmatpush1.msra.mxu0 %v838
      %854 = vmatprep.subr.mxu0 0.0
      %855 = vmatpush1.msra.mxu0 0.0
      %856 = vmatprep.subr.mxu0 0.0
      %857 = vmatpush1.msra.mxu0 0.0
      %858 = vmatprep.subr.mxu0 0.0
      %859 = vmatpush1.msra.mxu0 0.0
      %860 = vmatprep.subr.mxu0 0.0
      %861 = vmatpush1.msra.mxu0 0.0
      %862 = vmatprep.subr.mxu0 0.0
      %863 = vmatpush1.msra.mxu0 0.0
      %864 = vmatprep.subr.mxu0 0.0
      %865 = vmatpush1.msra.mxu0 0.0
      %866 = vmatprep.subr.mxu0 0.0
      %867 = vmatpush1.msra.mxu0 0.0
      %868 = vmatprep.subr.mxu0 0.0
      %869 = vmatpush1.msra.mxu0 0.0
      %870 = vmatprep.subr.mxu0 0.0
      %871 = vmatpush1.msra.mxu0 0.0
      %872 = vmatprep.subr.mxu0 0.0
      %873 = vmatpush1.msra.mxu0 0.0
      %874 = vmatprep.subr.mxu0 0.0
      %875 = vmatpush1.msra.mxu0 0.0
      %876 = vmatprep.subr.mxu0 0.0
      %877 = vmatpush1.msra.mxu0 0.0
      %878 = vmatprep.subr.mxu0 0.0
      %879 = vmatpush1.msra.mxu0 0.0
      %880 = vmatprep.subr.mxu0 0.0
      %881 = vmatpush1.msra.mxu0 0.0
      %882 = vmatprep.subr.mxu0 0.0
      %883 = vmatpush1.msra.mxu0 0.0
      %884 = vmatprep.subr.mxu0 0.0
      %885 = vmatpush1.msra.mxu0 0.0
      %886 = vmatprep.subr.mxu0 0.0
      %887 = vmatpush1.msra.mxu0 0.0
      %888 = vmatprep.subr.mxu0 0.0
      %889 = vmatpush1.msra.mxu0 0.0
      %890 = vmatprep.subr.mxu0 0.0
      %891 = vmatpush1.msra.mxu0 0.0
      %892 = vmatprep.subr.mxu0 0.0
      %893 = vmatpush1.msra.mxu0 0.0
      %894 = vmatprep.subr.mxu0 0.0
      %895 = vmatpush1.msra.mxu0 0.0
      %896 = vmatprep.subr.mxu0 0.0
      %897 = vmatpush1.msra.mxu0 0.0
      %898 = vmatprep.subr.mxu0 0.0
      %899 = vmatpush1.msra.mxu0 0.0
      %900 = vmatprep.subr.mxu0 0.0
      %901 = vmatpush1.msra.mxu0 0.0
      %902 = vmatprep.subr.mxu0 0.0
      %903 = vmatpush1.msra.mxu0 0.0
      %904 = vmatprep.subr.mxu0 0.0
      %905 = vmatpush1.msra.mxu0 0.0
      %906 = vmatprep.subr.mxu0 0.0
      %907 = vmatpush1.msra.mxu0 0.0
      %908 = vmatprep.subr.mxu0 0.0
      %909 = vmatpush1.msra.mxu0 0.0
      %910 = vmatprep.mubr.f32.mxu0 0.0
      %911 = vmatmul.mubr.f32.gmra.mrb[0].mxu0 %v844
      %v912 = vpop.f32.mrb[0].mxu0
      %v913 = vadd.f32 0.0, %v912
      %v914 = vpop.f32.mrb[0].mxu0
      %915 = vdwg.mxu0
      %v916 = vadd.f32 %v828, %v913
      %v917 = vld [vmem:[%s3] sm:$0x1f]
      %v918 = vadd.f32 %v916, %v917
      %vm919 = vcmask 4096
      %920 = vst.msk [vmem:[%s445] sm:$0x1f] %vm919, %v918
      %v921 = vld [vmem:[%s4] sm:$0xff]
      %v922 = vld [vmem:[%s4 + $0x8] sm:$0xff]
      %v923 = vld [vmem:[%s5] sm:$0xff]
      %v924 = vld [vmem:[%s5 + $0x8] sm:$0xff]
      %926 = vset.pattern.permute.xlu0 0
      %927 = vperm.xlu0 %926, %v923
      %v928 = vpop.permute.xlu0 %927
      %931 = vset.pattern.permute.xlu0 0
      %932 = vperm.xlu0 %931, %v924
      %v933 = vpop.permute.xlu0 %932
      %v936 = vsel %vm594, %v921, 0
      %v939 = vsel %vm594, %v922, 0
      %941 = vmatprep.subr.mxu0 0.0
      %942 = vmatpush1.msra.mxu0 %v557
      %943 = vmatprep.subr.mxu0 0.0
      %944 = vmatpush1.msra.mxu0 %v562
      %945 = vmatprep.subr.mxu0 0.0
      %946 = vmatpush1.msra.mxu0 %v567
      %947 = vmatprep.subr.mxu0 0.0
      %948 = vmatpush1.msra.mxu0 %v572
      %949 = vmatprep.subr.mxu0 0.0
      %950 = vmatpush1.msra.mxu0 0.0
      %951 = vmatprep.subr.mxu0 0.0
      %952 = vmatpush1.msra.mxu0 0.0
      %953 = vmatprep.subr.mxu0 0.0
      %954 = vmatpush1.msra.mxu0 0.0
      %955 = vmatprep.subr.mxu0 0.0
      %956 = vmatpush1.msra.mxu0 0.0
      %957 = vmatprep.subr.mxu0 0.0
      %958 = vmatpush1.msra.mxu0 0.0
      %959 = vmatprep.subr.mxu0 0.0
      %960 = vmatpush1.msra.mxu0 0.0
      %961 = vmatprep.subr.mxu0 0.0
      %962 = vmatpush1.msra.mxu0 0.0
      %963 = vmatprep.subr.mxu0 0.0
      %964 = vmatpush1.msra.mxu0 0.0
      %965 = vmatprep.subr.mxu0 0.0
      %966 = vmatpush1.msra.mxu0 0.0
      %967 = vmatprep.subr.mxu0 0.0
      %968 = vmatpush1.msra.mxu0 0.0
      %969 = vmatprep.subr.mxu0 0.0
      %970 = vmatpush1.msra.mxu0 0.0
      %971 = vmatprep.subr.mxu0 0.0
      %972 = vmatpush1.msra.mxu0 0.0
      %973 = vmatprep.subr.mxu0 0.0
      %974 = vmatpush1.msra.mxu0 0.0
      %975 = vmatprep.subr.mxu0 0.0
      %976 = vmatpush1.msra.mxu0 0.0
      %977 = vmatprep.subr.mxu0 0.0
      %978 = vmatpush1.msra.mxu0 0.0
      %979 = vmatprep.subr.mxu0 0.0
      %980 = vmatpush1.msra.mxu0 0.0
      %981 = vmatprep.subr.mxu0 0.0
      %982 = vmatpush1.msra.mxu0 0.0
      %983 = vmatprep.subr.mxu0 0.0
      %984 = vmatpush1.msra.mxu0 0.0
      %985 = vmatprep.subr.mxu0 0.0
      %986 = vmatpush1.msra.mxu0 0.0
      %987 = vmatprep.subr.mxu0 0.0
      %988 = vmatpush1.msra.mxu0 0.0
      %989 = vmatprep.subr.mxu0 0.0
      %990 = vmatpush1.msra.mxu0 0.0
      %991 = vmatprep.subr.mxu0 0.0
      %992 = vmatpush1.msra.mxu0 0.0
      %993 = vmatprep.subr.mxu0 0.0
      %994 = vmatpush1.msra.mxu0 0.0
      %995 = vmatprep.subr.mxu0 0.0
      %996 = vmatpush1.msra.mxu0 0.0
      %997 = vmatprep.subr.mxu0 0.0
      %998 = vmatpush1.msra.mxu0 0.0
      %999 = vmatprep.subr.mxu0 0.0
      %1000 = vmatpush1.msra.mxu0 0.0
      %1001 = vmatprep.subr.mxu0 0.0
      %1002 = vmatpush1.msra.mxu0 0.0
      %1003 = vmatprep.subr.mxu0 0.0
      %1004 = vmatpush1.msra.mxu0 0.0
      %1005 = vmatprep.mubr.f32.mxu0 0.0
      %1006 = vmatmul.mubr.f32.gmra.mrb[0].mxu0 %v936
      %v1007 = vpop.f32.mrb[0].mxu0
      %v1008 = vadd.f32 %v928, %v1007
      %v1009 = vpop.f32.mrb[0].mxu0
      %1010 = vmatprep.mubr.f32.mxu0 0.0
      %1011 = vmatmul.mubr.f32.gmra.mrb[0].mxu0 %v939
      %v1012 = vpop.f32.mrb[0].mxu0
      %v1013 = vadd.f32 %v933, %v1012
      %v1014 = vpop.f32.mrb[0].mxu0
      %1015 = vdwg.mxu0
      %vm1016 = vcmask 31744
      %v1017 = vsel %vm1016, %v1008, -inf
      %1018 = vmax.xlane.f32.xlu0 %v1017
      %v1019 = vpop.xlane.xlu0 %1018
      %v1020 = vsel %vm1016, %v1013, -inf
      %1021 = vmax.xlane.f32.xlu0 %v1020
      %v1022 = vpop.xlane.xlu0 %1021
      %v1023 = vld [vmem:[%s6] sm:$0xff]
      %v1024 = vld [vmem:[%s6 + $0x8] sm:$0xff]
      %v1025 = vld [vmem:[%s6 + $0x10] sm:$0xff]
      %v1026 = vld [vmem:[%s6 + $0x18] sm:$0xff]
      %v1027 = vld [vmem:[%s7] sm:$0xff]
      %v1028 = vld [vmem:[%s7 + $0x8] sm:$0xff]
      %v1029 = vld [vmem:[%s7 + $0x10] sm:$0xff]
      %v1030 = vld [vmem:[%s7 + $0x18] sm:$0xff]
      %vm1031 = vcmask 130048
      %v1033 = vsel %vm1031, %v1023, 0
      %v1036 = vsel %vm1031, %v1024, 0
      %v1039 = vsel %vm1031, %v1025, 0
      %v1042 = vsel %vm1031, %v1026, 0
      %1044 = vmatprep.subr.mxu0 0.0
      %1045 = vmatpush1.msra.mxu0 %v1019
      %1046 = vmatprep.subr.mxu0 0.0
      %1047 = vmatpush1.msra.mxu0 %v1022
      %1048 = vmatprep.subr.mxu0 0.0
      %1049 = vmatpush1.msra.mxu0 0.0
      %1050 = vmatprep.subr.mxu0 0.0
      %1051 = vmatpush1.msra.mxu0 0.0
      %1052 = vmatprep.subr.mxu0 0.0
      %1053 = vmatpush1.msra.mxu0 0.0
      %1054 = vmatprep.subr.mxu0 0.0
      %1055 = vmatpush1.msra.mxu0 0.0
      %1056 = vmatprep.subr.mxu0 0.0
      %1057 = vmatpush1.msra.mxu0 0.0
      %1058 = vmatprep.subr.mxu0 0.0
      %1059 = vmatpush1.msra.mxu0 0.0
      %1060 = vmatprep.subr.mxu0 0.0
      %1061 = vmatpush1.msra.mxu0 0.0
      %1062 = vmatprep.subr.mxu0 0.0
      %1063 = vmatpush1.msra.mxu0 0.0
      %1064 = vmatprep.subr.mxu0 0.0
      %1065 = vmatpush1.msra.mxu0 0.0
      %1066 = vmatprep.subr.mxu0 0.0
      %1067 = vmatpush1.msra.mxu0 0.0
      %1068 = vmatprep.subr.mxu0 0.0
      %1069 = vmatpush1.msra.mxu0 0.0
      %1070 = vmatprep.subr.mxu0 0.0
      %1071 = vmatpush1.msra.mxu0 0.0
      %1072 = vmatprep.subr.mxu0 0.0
      %1073 = vmatpush1.msra.mxu0 0.0
      %1074 = vmatprep.subr.mxu0 0.0
      %1075 = vmatpush1.msra.mxu0 0.0
      %1076 = vmatprep.subr.mxu0 0.0
      %1077 = vmatpush1.msra.mxu0 0.0
      %1078 = vmatprep.subr.mxu0 0.0
      %1079 = vmatpush1.msra.mxu0 0.0
      %1080 = vmatprep.subr.mxu0 0.0
      %1081 = vmatpush1.msra.mxu0 0.0
      %1082 = vmatprep.subr.mxu0 0.0
      %1083 = vmatpush1.msra.mxu0 0.0
      %1084 = vmatprep.subr.mxu0 0.0
      %1085 = vmatpush1.msra.mxu0 0.0
      %1086 = vmatprep.subr.mxu0 0.0
      %1087 = vmatpush1.msra.mxu0 0.0
      %1088 = vmatprep.subr.mxu0 0.0
      %1089 = vmatpush1.msra.mxu0 0.0
      %1090 = vmatprep.subr.mxu0 0.0
      %1091 = vmatpush1.msra.mxu0 0.0
      %1092 = vmatprep.subr.mxu0 0.0
      %1093 = vmatpush1.msra.mxu0 0.0
      %1094 = vmatprep.subr.mxu0 0.0
      %1095 = vmatpush1.msra.mxu0 0.0
      %1096 = vmatprep.subr.mxu0 0.0
      %1097 = vmatpush1.msra.mxu0 0.0
      %1098 = vmatprep.subr.mxu0 0.0
      %1099 = vmatpush1.msra.mxu0 0.0
      %1100 = vmatprep.subr.mxu0 0.0
      %1101 = vmatpush1.msra.mxu0 0.0
      %1102 = vmatprep.subr.mxu0 0.0
      %1103 = vmatpush1.msra.mxu0 0.0
      %1104 = vmatprep.subr.mxu0 0.0
      %1105 = vmatpush1.msra.mxu0 0.0
      %1106 = vmatprep.subr.mxu0 0.0
      %1107 = vmatpush1.msra.mxu0 0.0
      %1108 = vmatprep.mubr.f32.mxu0 0.0
      %1109 = vmatmul.mubr.f32.gmra.mrb[0].mxu0 %v1033
      %v1110 = vpop.f32.mrb[0].mxu0
      %v1111 = vadd.f32 %v1027, %v1110
      %v1112 = vpop.f32.mrb[0].mxu0
      %1113 = vmatprep.mubr.f32.mxu0 0.0
      %1114 = vmatmul.mubr.f32.gmra.mrb[0].mxu0 %v1036
      %v1115 = vpop.f32.mrb[0].mxu0
      %v1116 = vadd.f32 %v1028, %v1115
      %v1117 = vpop.f32.mrb[0].mxu0
      %1118 = vmatprep.mubr.f32.mxu0 0.0
      %1119 = vmatmul.mubr.f32.gmra.mrb[0].mxu0 %v1039
      %v1120 = vpop.f32.mrb[0].mxu0
      %v1121 = vadd.f32 %v1029, %v1120
      %v1122 = vpop.f32.mrb[0].mxu0
      %1123 = vmatprep.mubr.f32.mxu0 0.0
      %1124 = vmatmul.mubr.f32.gmra.mrb[0].mxu0 %v1042
      %v1125 = vpop.f32.mrb[0].mxu0
      %v1126 = vadd.f32 %v1030, %v1125
      %v1127 = vpop.f32.mrb[0].mxu0
      %1128 = vdwg.mxu0
      %v1129 = vld [vmem:[%s8] sm:$0xff]
      %v1130 = vld [vmem:[%s8 + $0x8] sm:$0xff]
      %v1131 = vld [vmem:[%s8 + $0x10] sm:$0xff]
      %v1132 = vld [vmem:[%s8 + $0x18] sm:$0xff]
      %v1133 = vmul.f32 %v1111, %v1129
      %v1134 = vmul.f32 %v1116, %v1130
      %v1135 = vmul.f32 %v1121, %v1131
      %v1136 = vmul.f32 %v1126, %v1132
      %v1137 = vld [vmem:[%s9] sm:$0xff]
      %v1138 = vld [vmem:[%s9 + $0x8] sm:$0xff]
      %v1139 = vld [vmem:[%s9 + $0x10] sm:$0xff]
      %v1140 = vld [vmem:[%s9 + $0x18] sm:$0xff]
      %v1141 = vadd.f32 %v1133, %v1137
      %v1142 = vadd.f32 %v1134, %v1138
      %v1143 = vadd.f32 %v1135, %v1139
      %v1144 = vadd.f32 %v1136, %v1140
      %v1145 = vld [vmem:[%s10] sm:$0x3]
      %v1146 = vld [vmem:[%s11] sm:$0x3]
      %v1148 = vsel %vm594, %v1145, 0
      %1150 = vmatprep.subr.mxu0 0.0
      %1151 = vmatpush1.msra.mxu0 %v1141
      %1152 = vmatprep.subr.mxu0 0.0
      %1153 = vmatpush1.msra.mxu0 %v1142
      %1154 = vmatprep.subr.mxu0 0.0
      %1155 = vmatpush1.msra.mxu0 %v1143
      %1156 = vmatprep.subr.mxu0 0.0
      %1157 = vmatpush1.msra.mxu0 %v1144
      %1158 = vmatprep.subr.mxu0 0.0
      %1159 = vmatpush1.msra.mxu0 0.0
      %1160 = vmatprep.subr.mxu0 0.0
      %1161 = vmatpush1.msra.mxu0 0.0
      %1162 = vmatprep.subr.mxu0 0.0
      %1163 = vmatpush1.msra.mxu0 0.0
      %1164 = vmatprep.subr.mxu0 0.0
      %1165 = vmatpush1.msra.mxu0 0.0
      %1166 = vmatprep.subr.mxu0 0.0
      %1167 = vmatpush1.msra.mxu0 0.0
      %1168 = vmatprep.subr.mxu0 0.0
      %1169 = vmatpush1.msra.mxu0 0.0
      %1170 = vmatprep.subr.mxu0 0.0
      %1171 = vmatpush1.msra.mxu0 0.0
      %1172 = vmatprep.subr.mxu0 0.0
      %1173 = vmatpush1.msra.mxu0 0.0
      %1174 = vmatprep.subr.mxu0 0.0
      %1175 = vmatpush1.msra.mxu0 0.0
      %1176 = vmatprep.subr.mxu0 0.0
      %1177 = vmatpush1.msra.mxu0 0.0
      %1178 = vmatprep.subr.mxu0 0.0
      %1179 = vmatpush1.msra.mxu0 0.0
      %1180 = vmatprep.subr.mxu0 0.0
      %1181 = vmatpush1.msra.mxu0 0.0
      %1182 = vmatprep.subr.mxu0 0.0
      %1183 = vmatpush1.msra.mxu0 0.0
      %1184 = vmatprep.subr.mxu0 0.0
      %1185 = vmatpush1.msra.mxu0 0.0
      %1186 = vmatprep.subr.mxu0 0.0
      %1187 = vmatpush1.msra.mxu0 0.0
      %1188 = vmatprep.subr.mxu0 0.0
      %1189 = vmatpush1.msra.mxu0 0.0
      %1190 = vmatprep.subr.mxu0 0.0
      %1191 = vmatpush1.msra.mxu0 0.0
      %1192 = vmatprep.subr.mxu0 0.0
      %1193 = vmatpush1.msra.mxu0 0.0
      %1194 = vmatprep.subr.mxu0 0.0
      %1195 = vmatpush1.msra.mxu0 0.0
      %1196 = vmatprep.subr.mxu0 0.0
      %1197 = vmatpush1.msra.mxu0 0.0
      %1198 = vmatprep.subr.mxu0 0.0
      %1199 = vmatpush1.msra.mxu0 0.0
      %1200 = vmatprep.subr.mxu0 0.0
      %1201 = vmatpush1.msra.mxu0 0.0
      %1202 = vmatprep.subr.mxu0 0.0
      %1203 = vmatpush1.msra.mxu0 0.0
      %1204 = vmatprep.subr.mxu0 0.0
      %1205 = vmatpush1.msra.mxu0 0.0
      %1206 = vmatprep.subr.mxu0 0.0
      %1207 = vmatpush1.msra.mxu0 0.0
      %1208 = vmatprep.subr.mxu0 0.0
      %1209 = vmatpush1.msra.mxu0 0.0
      %1210 = vmatprep.subr.mxu0 0.0
      %1211 = vmatpush1.msra.mxu0 0.0
      %1212 = vmatprep.subr.mxu0 0.0
      %1213 = vmatpush1.msra.mxu0 0.0
      %1214 = vmatprep.mubr.f32.mxu0 0.0
      %1215 = vmatmul.mubr.f32.gmra.mrb[0].mxu0 %v1148
      %v1216 = vpop.f32.mrb[0].mxu0
      %v1217 = vadd.f32 %v1146, %v1216
      %v1218 = vpop.f32.mrb[0].mxu0
      %1219 = vdwg.mxu0
      %vm1220 = vcmask 1024
      %1221 = vst.msk [vmem:[%s449] sm:$0x3] %vm1220, %v1217
      %p1222 = scmp.lt.s32.totalorder %s25, 1
      %s1223 = scalar_select %p1222, %s25, 1
      %s1224 = smul.addr %s1223, 8
      %s1225 = scalar_lea.vmem %s12, %s1224
      %p1226 = scmp.lt.s32.totalorder %s25, 1
      %s1227 = scalar_select %p1226, %s25, 1
      %s1228 = smul.addr %s1227, 2
      %s1229 = scalar_lea.vmem %s13, %s1228
      // Predicated region
      $region69: #{self_match_net_forward.1} parent=67 // pred_check
        %p1230 = pneg %p300
      $region70: #{self_match_net_forward.1} parent=67 // pred_check_branch
        %1232 = sbr.rel (%p1230) target = $region72
      $region71: #{self_match_net_forward.1} parent=67 // pred_region
        _
      $region72: #{self_match_net_forward.1} parent=67 // pred_fallthru
        _
      // Predicated region
      $region73: #{self_match_net_forward.1} parent=67 // pred_check
        %p1233 = pneg %p326
      $region74: #{self_match_net_forward.1} parent=67 // pred_check_branch
        %1235 = sbr.rel (%p1233) target = $region76
      $region75: #{self_match_net_forward.1} parent=67 // pred_region
        _
      $region76: #{self_match_net_forward.1} parent=67 // pred_fallthru
        _
    $region68: #{self_match_net_forward.1} parent=5 // pred_fallthru
      _
    %p1236 = scmp.le.s32.totalorder 2, %s20
    // Predicated region
    $region77: #{self_match_net_forward.1} parent=5 // pred_check
      %p1237 = pneg %p1236
    $region78: #{self_match_net_forward.1} parent=5 // pred_check_branch
      %1239 = sbr.rel (%p1237) target = $region80
    $region79: #{self_match_net_forward.1} parent=5 // pred_region
      %s1240 = ssub.s32 %s20, 2
      // Predicated region
      $region81: #{self_match_net_forward.1} parent=79 // pred_check
        %p1241 = pneg %p306
      $region82: #{self_match_net_forward.1} parent=79 // pred_check_branch
        %1243 = sbr.rel (%p1241) target = $region84
      $region83: #{self_match_net_forward.1} parent=79 // pred_region
        %p1244 = scmp.lt.s32.totalorder %s26, 1
        %s1245 = scalar_select %p1244, %s26, 1
        %s1246 = smul.addr %s1245, 8
        %s1247 = scalar_lea.vmem %s12, %s1246
      $region84: #{self_match_net_forward.1} parent=79 // pred_fallthru
        _
      // Predicated region
      $region85: #{self_match_net_forward.1} parent=79 // pred_check
        %p1248 = pneg %p332
      $region86: #{self_match_net_forward.1} parent=79 // pred_check_branch
        %1250 = sbr.rel (%p1248) target = $region88
      $region87: #{self_match_net_forward.1} parent=79 // pred_region
        %p1251 = scmp.lt.s32.totalorder %s26, 1
        %s1252 = scalar_select %p1251, %s26, 1
        %s1253 = smul.addr %s1252, 2
        %s1254 = scalar_lea.vmem %s13, %s1253
      $region88: #{self_match_net_forward.1} parent=79 // pred_fallthru
        _
    $region80: #{self_match_net_forward.1} parent=5 // pred_fallthru
      _
  $region6: #{self_match_net_forward.1} parent=0 // loop_footer
    %s24 = sadd.s32 1, %s20
  $region7: #{self_match_net_forward.1} parent=0 // loop_footer_branch
    %19 = sbr.rel target = $region3
  $region8: #{self_match_net_forward.1} parent=0 // loop_exit
    _

</llo_original>
